<compile_context>
chip_gen: v5e
topology: v5e:2x2
jax: 0.10.0
libtpu: 0.0.40
codegen_flags: <defaults>
</compile_context>

<pallas_src>
import functools

import jax
import jax.numpy as jnp
from jax.experimental import pallas as pl
from jax.experimental.pallas import tpu as pltpu

LN_EPS = 1e-6
BN_EPS = 1e-5

# Resolved lazily on first call: 1 if single-buffered weight BlockSpecs
# (pipeline_mode=pl.Buffered(1)) lower on this build, else 2.
_WEIGHT_BUFFERS = None


def _ceil_to(v, m):
    return (v + m - 1) // m * m


def _pad2(a, rows, cols):
    return jnp.pad(a, ((0, rows - a.shape[0]), (0, cols - a.shape[1])))


def _vmem_capacity_bytes():
    try:
        info = pltpu.get_tpu_info()
        for attr in ("vmem_capacity_bytes", "vmem_bytes", "vmem_size_bytes"):
            v = getattr(info, attr, None)
            if v:
                return int(v)
    except Exception:
        pass
    return 64 * 1024 * 1024  # conservative (v7x-sized) fallback


def _pick_tb(B, cap=256):
    """Largest multiple-of-8 divisor of B that is <= cap and gives >= 2 grid steps
    (so v7x's second TensorCore gets work); falls back to the whole batch."""
    cands = [t for t in range(8, min(cap, B // 2) + 1, 8) if B % t == 0]
    return max(cands) if cands else B


# --------------------------------------------------------------------------- #
# Kernel
# --------------------------------------------------------------------------- #
def diffmlp_kernel(x_ref, c_ref,
                   w_ada_ref, b_ada_ref,
                   w_in_ref, b_in_ref,
                   w_out_ref, b_out_ref,
                   o_ref, *, real_h, ln_eps):
    """All feature dims are padded to multiples of 128; padded lanes of x, c and
    of every weight/bias are zero, so results in the real lanes are exact."""
    x = x_ref[...].astype(jnp.float32)               # [tb, Hp]
    c = c_ref[...].astype(jnp.float32)               # [tb, Hp]
    hp = x.shape[-1]
    wdt = w_ada_ref.dtype                             # matmul operand dtype

    c_silu = (c * jax.nn.sigmoid(c)).astype(wdt)      # SiLU(c), cast once for MXU
    inv_h = 1.0 / real_h

    def ln(v):
        # Single-pass variance; padded lanes of v are zero so lane-axis sums equal
        # sums over the real features.  Clamp avoids rsqrt of a tiny negative.
        s = jnp.sum(v, axis=-1, keepdims=True)
        ss = jnp.sum(v * v, axis=-1, keepdims=True)
        mu = s * inv_h
        var = jnp.maximum(ss * inv_h - mu * mu, 0.0)
        return (v - mu) * jax.lax.rsqrt(var + ln_eps)

    def block(xv, half):
        # adaLN half: [tb, 3*Hp] (shift | scale | gate), each chunk 128-aligned.
        mod = jnp.dot(c_silu, w_ada_ref[half],
                      preferred_element_type=jnp.float32) + b_ada_ref[half]
        shift = mod[:, 0:hp]
        scale = mod[:, hp:2 * hp]
        gate = mod[:, 2 * hp:3 * hp]

        h = ln(xv) * (1.0 + scale) + shift            # modulate(norm(x), shift, scale)
        # Linear -> ReLU -> Linear.  Eval-mode BatchNorm folded into w_out/b_out;
        # Dropout(0.1) is identity in eval mode.
        h1 = jnp.dot(h.astype(wdt), w_in_ref[half],
                     preferred_element_type=jnp.float32) + b_in_ref[half]
        h1 = jnp.maximum(h1, 0.0)
        y = jnp.dot(h1.astype(wdt), w_out_ref[half],
                    preferred_element_type=jnp.float32) + b_out_ref[half]
        return xv + gate * y

    x = block(x, 0)
    x = block(x, 1)
    o_ref[...] = x.astype(o_ref.dtype)


# --------------------------------------------------------------------------- #
# Host-side parameter preparation (BN fold + lane-dense padding + stacking).
# Call ONCE per model and cache the result; this is not the hot path.
# --------------------------------------------------------------------------- #
def _fold_bn(wb, bb, g, be, rm, rv):
    s = g * jax.lax.rsqrt(rv + BN_EPS)                # [1, Hm]
    wb_f = wb * jnp.reshape(s, (-1, 1))               # scale rows of second linear
    bb_f = bb + (be - rm * s) @ wb
    return wb_f, bb_f


def _prepare_params(params, H, Hm, Hp, Hmp, param_dtype):
    (w_ada, b_ada,
     w1a, b1a, g1, be1, rm1, rv1, w1b, b1b,
     w2a, b2a, g2, be2, rm2, rv2, w2b, b2b) = params

    w1b_f, b1b_f = _fold_bn(w1b, b1b, g1, be1, rm1, rv1)
    w2b_f, b2b_f = _fold_bn(w2b, b2b, g2, be2, rm2, rv2)

    # adaLN weight split into two halves of 3 chunks each; every chunk is padded
    # separately so it starts on a 128-lane boundary inside the kernel.
    w_ada_p = jnp.zeros((2, Hp, 3 * Hp), jnp.float32)
    b_ada_p = jnp.zeros((2, 1, 3 * Hp), jnp.float32)
    for half in range(2):
        for k in range(3):
            src_c0 = (3 * half + k) * H
            w_ada_p = w_ada_p.at[half, :H, k * Hp:k * Hp + H].set(
                w_ada[:, src_c0:src_c0 + H])
            b_ada_p = b_ada_p.at[half, :, k * Hp:k * Hp + H].set(
                b_ada[:, src_c0:src_c0 + H])

    w_in = jnp.stack([_pad2(w1a, Hp, Hmp), _pad2(w2a, Hp, Hmp)])        # [2,Hp,Hmp]
    b_in = jnp.stack([_pad2(b1a, 1, Hmp), _pad2(b2a, 1, Hmp)])          # [2,1,Hmp]
    w_out = jnp.stack([_pad2(w1b_f, Hmp, Hp), _pad2(w2b_f, Hmp, Hp)])   # [2,Hmp,Hp]
    b_out = jnp.stack([_pad2(b1b_f, 1, Hp), _pad2(b2b_f, 1, Hp)])       # [2,1,Hp]

    # Weights feed the MXU (bf16 by default); biases stay f32 (added to f32 acc).
    return (w_ada_p.astype(param_dtype), b_ada_p,
            w_in.astype(param_dtype), b_in,
            w_out.astype(param_dtype), b_out)


def prepare_diff_mlp_params(params, *, param_dtype=jnp.bfloat16, lane=128):
    """One-time prep: BN fold, chunk-aligned zero padding, dtype cast, stacking.
    Returns (H, Hp, Hmp, weights) for diff_mlp_block_prepared."""
    w_ada = params[0]
    H = w_ada.shape[0]
    Hm = params[2].shape[1]
    Hp = _ceil_to(H, lane)
    Hmp = _ceil_to(Hm, lane)
    weights = _prepare_params(params, H, Hm, Hp, Hmp, param_dtype)
    weights = tuple(jax.device_put(w) for w in weights)
    return (H, Hp, Hmp, weights)


# --------------------------------------------------------------------------- #
# pallas_call wrapper
# --------------------------------------------------------------------------- #
def _pallas_forward(x_p, c_p, weights, *, H, Hp, Hmp, tb, weight_buffers, out_dtype):
    B = x_p.shape[0]
    grid = (B // tb,)

    row_spec = pl.BlockSpec((tb, Hp), lambda i: (i, 0))

    def full_spec(p):
        # Grid-invariant weight/bias block: same block every step -> no re-DMA.
        nd = p.ndim
        if weight_buffers == 1:
            return pl.BlockSpec(p.shape, lambda i, nd=nd: (0,) * nd,
                                pipeline_mode=pl.Buffered(1))
        return pl.BlockSpec(p.shape, lambda i, nd=nd: (0,) * nd)

    in_specs = [row_spec, row_spec] + [full_spec(p) for p in weights]

    # Generation-aware VMEM budget: double-buffered activation row tiles,
    # weight stacks (x weight_buffers), and the dominant in-kernel f32
    # temporaries (x/c/h, half-mod [tb,3Hp], h1/y [tb,Hmp]).
    itemsize = lambda a: jnp.dtype(a.dtype).itemsize
    weight_bytes = sum(int(w.nbytes) for w in weights)
    act_tile_bytes = tb * Hp * (itemsize(x_p) + itemsize(c_p)
                                + jnp.dtype(out_dtype).itemsize)
    temp_bytes = tb * 4 * (5 * Hp + 3 * Hp + 2 * Hmp)
    cap = _vmem_capacity_bytes()
    vmem_limit = (2 * act_tile_bytes + weight_buffers * weight_bytes
                  + temp_bytes + (4 << 20))
    vmem_limit = int(min(max(vmem_limit, 16 << 20), cap - (8 << 20)))

    flops = 2 * B * (Hp * 6 * Hp + 2 * (Hp * Hmp + Hmp * Hp))
    bytes_accessed = int(x_p.nbytes + c_p.nbytes + weight_bytes
                         + B * Hp * jnp.dtype(out_dtype).itemsize)
    cost = pl.CostEstimate(flops=flops,
                           transcendentals=B * Hp + 4 * B,  # sigmoid + LN rsqrt
                           bytes_accessed=bytes_accessed)

    kernel = functools.partial(diffmlp_kernel, real_h=H, ln_eps=LN_EPS)

    return pl.pallas_call(
        kernel,
        out_shape=jax.ShapeDtypeStruct((B, Hp), out_dtype),
        grid=grid,
        in_specs=in_specs,
        out_specs=row_spec,
        compiler_params=pltpu.CompilerParams(
            dimension_semantics=("parallel",),
            vmem_limit_bytes=vmem_limit),
        cost_estimate=cost,
    )(x_p, c_p, *weights)


def diff_mlp_block_prepared(x, c, prepared, *, tb=None, tb_cap=256):
    """Hot path: x, c: [B, H]; prepared from prepare_diff_mlp_params()."""
    global _WEIGHT_BUFFERS
    H, Hp, Hmp, weights = prepared
    B, Hx = x.shape
    assert Hx == H, f"feature dim {Hx} != prepared {H}"

    if tb is None:
        tb = _pick_tb(B, tb_cap)
    assert B % tb == 0, f"batch {B} must be divisible by tile {tb}"
    assert tb == B or tb % 8 == 0, "batch tile must be a multiple of 8 (or == B)"

    # Lane-dense, zero-padded activations in their native dtype (cast to f32
    # happens inside the kernel, only for LN / residual math).
    x_p = _pad2(x, B, Hp)
    c_p = _pad2(c, B, Hp)

    modes = (_WEIGHT_BUFFERS,) if _WEIGHT_BUFFERS is not None else (1, 2)
    last_err = None
    for wb in modes:
        try:
            out_p = _pallas_forward(x_p, c_p, weights, H=H, Hp=Hp, Hmp=Hmp,
                                    tb=tb, weight_buffers=wb, out_dtype=x.dtype)
            _WEIGHT_BUFFERS = wb
            return out_p[:, :H]
        except Exception as e:  # fall back to default double-buffered weights
            last_err = e
    raise last_err


def diff_mlp_block(x, c, params, *, param_dtype=jnp.bfloat16, tb=None):
    """Convenience wrapper.  For repeated calls, hoist prepare_diff_mlp_params()
    out of the hot path and call diff_mlp_block_prepared() directly."""
    prepared = prepare_diff_mlp_params(params, param_dtype=param_dtype)
    return diff_mlp_block_prepared(x, c, prepared, tb=tb)


# --------------------------------------------------------------------------- #
# Pure-JAX reference (unpadded, unfused; mirrors the PyTorch module in eval mode)
# --------------------------------------------------------------------------- #
def _layernorm_ref(x, eps):
    mu = jnp.mean(x, axis=-1, keepdims=True)
    var = jnp.mean((x - mu) ** 2, axis=-1, keepdims=True)
    return (x - mu) * jax.lax.rsqrt(var + eps)


def diff_mlp_block_ref(x, c, params):
    (w_ada, b_ada,
     w1a, b1a, g1, be1, rm1, rv1, w1b, b1b,
     w2a, b2a, g2, be2, rm2, rv2, w2b, b2b) = params
    H = x.shape[-1]
    c_silu = c * jax.nn.sigmoid(c)
    mod = c_silu @ w_ada + b_ada
    shift1, scale1, gate1, shift2, scale2, gate2 = [
        mod[:, i * H:(i + 1) * H] for i in range(6)]

    def mlp(h, wa, ba, g, be, rm, rv, wb, bb):
        h1 = jnp.maximum(h @ wa + ba, 0.0)
        h1 = (h1 - rm) * jax.lax.rsqrt(rv + BN_EPS) * g + be
        return h1 @ wb + bb

    x = x + gate1 * mlp(_layernorm_ref(x, LN_EPS) * (1.0 + scale1) + shift1,
                        w1a, b1a, g1, be1, rm1, rv1, w1b, b1b)
    x = x + gate2 * mlp(_layernorm_ref(x, LN_EPS) * (1.0 + scale2) + shift2,
                        w2a, b2a, g2, be2, rm2, rv2, w2b, b2b)
    return x


# --------------------------------------------------------------------------- #
# Demo / self-check
# --------------------------------------------------------------------------- #
if __name__ == "__main__":
    hidden_size = 16
    H = hidden_size * 2            # 32   (module doubles hidden_size)
    Hm = int(H * 2.0)              # 64   (mlp_ratio = 2.0)
    B = 16

    key = jax.random.PRNGKey(0)
    ks = jax.random.split(key, 12)

    x = jax.random.normal(ks[0], (B, H), jnp.float32)
    c = jax.random.normal(ks[1], (B, H), jnp.float32)

    def linear(k, din, dout):
        kw, kb = jax.random.split(k)
        w = jax.random.normal(kw, (din, dout), jnp.float32) * 0.02
        b = jax.random.normal(kb, (1, dout), jnp.float32) * 0.02
        return w, b

    def bn(k, d):
        k1, k2, k3, k4 = jax.random.split(k, 4)
        gamma = 1.0 + 0.1 * jax.random.normal(k1, (1, d), jnp.float32)
        beta = 0.05 * jax.random.normal(k2, (1, d), jnp.float32)
        r_mean = 0.1 * jax.random.normal(k3, (1, d), jnp.float32)
        r_var = 0.5 + jnp.abs(jax.random.normal(k4, (1, d), jnp.float32)) * 0.5
        return gamma, beta, r_mean, r_var

    w_ada, b_ada = linear(ks[2], H, 6 * H)
    w1a, b1a = linear(ks[3], H, Hm)
    w1b, b1b = linear(ks[4], Hm, H)
    w2a, b2a = linear(ks[5], H, Hm)
    w2b, b2b = linear(ks[6], Hm, H)
    g1, be1, rm1, rv1 = bn(ks[7], Hm)
    g2, be2, rm2, rv2 = bn(ks[8], Hm)

    params = (w_ada, b_ada,
              w1a, b1a, g1, be1, rm1, rv1, w1b, b1b,
              w2a, b2a, g2, be2, rm2, rv2, w2b, b2b)

    ref = diff_mlp_block_ref(x, c, params)

    # f32 weights: tight check against the unfused reference.
    prep_f32 = prepare_diff_mlp_params(params, param_dtype=jnp.float32)
    out = diff_mlp_block_prepared(x, c, prep_f32)
    out = jax.block_until_ready(out)
    assert out.shape == (B, H) and out.dtype == jnp.float32
    assert jnp.allclose(out, ref, atol=1e-4, rtol=1e-4), \
        f"f32 max err {jnp.max(jnp.abs(out - ref))}"

    # Default path: bf16 matmul operands, f32 accumulation / LN / residual.
    prep_bf16 = prepare_diff_mlp_params(params)           # param_dtype=bfloat16
    out_bf16 = diff_mlp_block_prepared(x, c, prep_bf16)
    out_bf16 = jax.block_until_ready(out_bf16)
    assert out_bf16.shape == (B, H)
    assert float(jnp.max(jnp.abs(out_bf16 - ref))) < 5e-2, \
        f"bf16 max err {jnp.max(jnp.abs(out_bf16 - ref))}"

    print("KERNEL_OK")
</pallas_src>

<mosaic_0001>
module attributes {stable_mosaic.version = 11 : i64} {
  func.func @diffmlp_kernel(%arg0: i32, %arg1: memref<8x128xf32, #tpu.memory_space<vmem>>, %arg2: memref<8x128xf32, #tpu.memory_space<vmem>>, %arg3: memref<2x128x384xf32, #tpu.memory_space<vmem>>, %arg4: memref<2x1x384xf32, #tpu.memory_space<vmem>>, %arg5: memref<2x128x128xf32, #tpu.memory_space<vmem>>, %arg6: memref<2x1x128xf32, #tpu.memory_space<vmem>>, %arg7: memref<2x128x128xf32, #tpu.memory_space<vmem>>, %arg8: memref<2x1x128xf32, #tpu.memory_space<vmem>>, %arg9: memref<8x128xf32, #tpu.memory_space<vmem>>) attributes {dimension_semantics = [#tpu.dimension_semantics<parallel>], iteration_bounds = array<i64: 2>, scalar_prefetch = 0 : i64, scratch_operands = 0 : i64, tpu.core_type = #tpu.core_type<tc>, window_params = [{transform_indices = @transform_0, window_bounds = array<i64: 8, 128>}, {transform_indices = @transform_1, window_bounds = array<i64: 8, 128>}, {pipeline_mode = #tpu.pipeline_mode<synchronous>, transform_indices = @transform_2, window_bounds = array<i64: 2, 128, 384>}, {pipeline_mode = #tpu.pipeline_mode<synchronous>, transform_indices = @transform_3, window_bounds = array<i64: 2, 1, 384>}, {pipeline_mode = #tpu.pipeline_mode<synchronous>, transform_indices = @transform_4, window_bounds = array<i64: 2, 128, 128>}, {pipeline_mode = #tpu.pipeline_mode<synchronous>, transform_indices = @transform_5, window_bounds = array<i64: 2, 1, 128>}, {pipeline_mode = #tpu.pipeline_mode<synchronous>, transform_indices = @transform_6, window_bounds = array<i64: 2, 128, 128>}, {pipeline_mode = #tpu.pipeline_mode<synchronous>, transform_indices = @transform_7, window_bounds = array<i64: 2, 1, 128>}, {transform_indices = @transform_8, window_bounds = array<i64: 8, 128>}]} {
    %c0 = arith.constant 0 : index
    %c0_0 = arith.constant 0 : index
    %0 = vector.load %arg1[%c0, %c0_0] : memref<8x128xf32, #tpu.memory_space<vmem>>, vector<8x128xf32>
    %c0_1 = arith.constant 0 : index
    %c0_2 = arith.constant 0 : index
    %1 = vector.load %arg2[%c0_1, %c0_2] : memref<8x128xf32, #tpu.memory_space<vmem>>, vector<8x128xf32>
    %2 = arith.negf %1 : vector<8x128xf32>
    %3 = math.exp %2 : vector<8x128xf32>
    %cst = arith.constant 1.000000e+00 : f32
    %4 = vector.broadcast %cst : f32 to vector<8x128xf32>
    %5 = arith.addf %4, %3 : vector<8x128xf32>
    %6 = arith.divf %4, %5 : vector<8x128xf32>
    %7 = arith.mulf %1, %6 : vector<8x128xf32>
    %c0_3 = arith.constant 0 : index
    %c0_4 = arith.constant 0 : index
    %c0_5 = arith.constant 0 : index
    %8 = vector.load %arg3[%c0_3, %c0_4, %c0_5] : memref<2x128x384xf32, #tpu.memory_space<vmem>>, vector<1x128x384xf32>
    %9 = vector.shape_cast %8 : vector<1x128x384xf32> to vector<128x384xf32>
    %cst_6 = arith.constant dense<0.000000e+00> : vector<8x384xf32>
    %10 = tpu.matmul %7, %9, %cst_6 {dimension_numbers = #tpu.dot_dimension_numbers<[1], [0], [0], [1], [0, 0, 1, 1], [], []>} : vector<8x128xf32>, vector<128x384xf32>, vector<8x384xf32> -> vector<8x384xf32>
    %c0_7 = arith.constant 0 : index
    %c0_8 = arith.constant 0 : index
    %c0_9 = arith.constant 0 : index
    %11 = vector.load %arg4[%c0_7, %c0_8, %c0_9] : memref<2x1x384xf32, #tpu.memory_space<vmem>>, vector<1x1x384xf32>
    %12 = vector.shape_cast %11 : vector<1x1x384xf32> to vector<1x384xf32>
    %13 = vector.broadcast %12 : vector<1x384xf32> to vector<8x384xf32>
    %14 = arith.addf %10, %13 : vector<8x384xf32>
    %15 = vector.extract_strided_slice %14 {offsets = [0, 0], sizes = [8, 128], strides = [1, 1]} : vector<8x384xf32> to vector<8x128xf32>
    %16 = vector.extract_strided_slice %14 {offsets = [0, 128], sizes = [8, 128], strides = [1, 1]} : vector<8x384xf32> to vector<8x128xf32>
    %17 = vector.extract_strided_slice %14 {offsets = [0, 256], sizes = [8, 128], strides = [1, 1]} : vector<8x384xf32> to vector<8x128xf32>
    %cst_10 = arith.constant dense<0.000000e+00> : vector<8xf32>
    %18 = vector.multi_reduction <add>, %0, %cst_10 [1] : vector<8x128xf32> to vector<8xf32>
    %19 = vector.shape_cast %18 : vector<8xf32> to vector<8x1xf32>
    %20 = arith.mulf %0, %0 : vector<8x128xf32>
    %cst_11 = arith.constant dense<0.000000e+00> : vector<8xf32>
    %21 = vector.multi_reduction <add>, %20, %cst_11 [1] : vector<8x128xf32> to vector<8xf32>
    %22 = vector.shape_cast %21 : vector<8xf32> to vector<8x1xf32>
    %cst_12 = arith.constant 3.125000e-02 : f32
    %23 = vector.broadcast %cst_12 : f32 to vector<8x1xf32>
    %24 = arith.mulf %19, %23 : vector<8x1xf32>
    %cst_13 = arith.constant 3.125000e-02 : f32
    %25 = vector.broadcast %cst_13 : f32 to vector<8x1xf32>
    %26 = arith.mulf %22, %25 : vector<8x1xf32>
    %27 = arith.mulf %24, %24 : vector<8x1xf32>
    %28 = arith.subf %26, %27 : vector<8x1xf32>
    %cst_14 = arith.constant 0.000000e+00 : f32
    %29 = vector.broadcast %cst_14 : f32 to vector<8x1xf32>
    %30 = arith.maximumf %28, %29 : vector<8x1xf32>
    %31 = vector.broadcast %24 : vector<8x1xf32> to vector<8x128xf32>
    %32 = arith.subf %0, %31 : vector<8x128xf32>
    %cst_15 = arith.constant 9.99999997E-7 : f32
    %33 = vector.broadcast %cst_15 : f32 to vector<8x1xf32>
    %34 = arith.addf %30, %33 : vector<8x1xf32>
    %35 = math.rsqrt %34 : vector<8x1xf32>
    %36 = vector.broadcast %35 : vector<8x1xf32> to vector<8x128xf32>
    %37 = arith.mulf %32, %36 : vector<8x128xf32>
    %cst_16 = arith.constant 1.000000e+00 : f32
    %38 = vector.broadcast %cst_16 : f32 to vector<8x128xf32>
    %39 = arith.addf %38, %16 : vector<8x128xf32>
    %40 = arith.mulf %37, %39 : vector<8x128xf32>
    %41 = arith.addf %40, %15 : vector<8x128xf32>
    %c0_17 = arith.constant 0 : index
    %c0_18 = arith.constant 0 : index
    %c0_19 = arith.constant 0 : index
    %42 = vector.load %arg5[%c0_17, %c0_18, %c0_19] : memref<2x128x128xf32, #tpu.memory_space<vmem>>, vector<1x128x128xf32>
    %43 = vector.shape_cast %42 : vector<1x128x128xf32> to vector<128x128xf32>
    %cst_20 = arith.constant dense<0.000000e+00> : vector<8x128xf32>
    %44 = tpu.matmul %41, %43, %cst_20 {dimension_numbers = #tpu.dot_dimension_numbers<[1], [0], [0], [1], [0, 0, 1, 1], [], []>} : vector<8x128xf32>, vector<128x128xf32>, vector<8x128xf32> -> vector<8x128xf32>
    %c0_21 = arith.constant 0 : index
    %c0_22 = arith.constant 0 : index
    %c0_23 = arith.constant 0 : index
    %45 = vector.load %arg6[%c0_21, %c0_22, %c0_23] : memref<2x1x128xf32, #tpu.memory_space<vmem>>, vector<1x1x128xf32>
    %46 = vector.shape_cast %45 : vector<1x1x128xf32> to vector<1x128xf32>
    %47 = vector.broadcast %46 : vector<1x128xf32> to vector<8x128xf32>
    %48 = arith.addf %44, %47 : vector<8x128xf32>
    %cst_24 = arith.constant 0.000000e+00 : f32
    %49 = vector.broadcast %cst_24 : f32 to vector<8x128xf32>
    %50 = arith.maximumf %48, %49 : vector<8x128xf32>
    %c0_25 = arith.constant 0 : index
    %c0_26 = arith.constant 0 : index
    %c0_27 = arith.constant 0 : index
    %51 = vector.load %arg7[%c0_25, %c0_26, %c0_27] : memref<2x128x128xf32, #tpu.memory_space<vmem>>, vector<1x128x128xf32>
    %52 = vector.shape_cast %51 : vector<1x128x128xf32> to vector<128x128xf32>
    %cst_28 = arith.constant dense<0.000000e+00> : vector<8x128xf32>
    %53 = tpu.matmul %50, %52, %cst_28 {dimension_numbers = #tpu.dot_dimension_numbers<[1], [0], [0], [1], [0, 0, 1, 1], [], []>} : vector<8x128xf32>, vector<128x128xf32>, vector<8x128xf32> -> vector<8x128xf32>
    %c0_29 = arith.constant 0 : index
    %c0_30 = arith.constant 0 : index
    %c0_31 = arith.constant 0 : index
    %54 = vector.load %arg8[%c0_29, %c0_30, %c0_31] : memref<2x1x128xf32, #tpu.memory_space<vmem>>, vector<1x1x128xf32>
    %55 = vector.shape_cast %54 : vector<1x1x128xf32> to vector<1x128xf32>
    %56 = vector.broadcast %55 : vector<1x128xf32> to vector<8x128xf32>
    %57 = arith.addf %53, %56 : vector<8x128xf32>
    %58 = arith.mulf %17, %57 : vector<8x128xf32>
    %59 = arith.addf %0, %58 : vector<8x128xf32>
    %c1 = arith.constant 1 : index
    %c0_32 = arith.constant 0 : index
    %c0_33 = arith.constant 0 : index
    %60 = vector.load %arg3[%c1, %c0_32, %c0_33] : memref<2x128x384xf32, #tpu.memory_space<vmem>>, vector<1x128x384xf32>
    %61 = vector.shape_cast %60 : vector<1x128x384xf32> to vector<128x384xf32>
    %cst_34 = arith.constant dense<0.000000e+00> : vector<8x384xf32>
    %62 = tpu.matmul %7, %61, %cst_34 {dimension_numbers = #tpu.dot_dimension_numbers<[1], [0], [0], [1], [0, 0, 1, 1], [], []>} : vector<8x128xf32>, vector<128x384xf32>, vector<8x384xf32> -> vector<8x384xf32>
    %c1_35 = arith.constant 1 : index
    %c0_36 = arith.constant 0 : index
    %c0_37 = arith.constant 0 : index
    %63 = vector.load %arg4[%c1_35, %c0_36, %c0_37] : memref<2x1x384xf32, #tpu.memory_space<vmem>>, vector<1x1x384xf32>
    %64 = vector.shape_cast %63 : vector<1x1x384xf32> to vector<1x384xf32>
    %65 = vector.broadcast %64 : vector<1x384xf32> to vector<8x384xf32>
    %66 = arith.addf %62, %65 : vector<8x384xf32>
    %67 = vector.extract_strided_slice %66 {offsets = [0, 0], sizes = [8, 128], strides = [1, 1]} : vector<8x384xf32> to vector<8x128xf32>
    %68 = vector.extract_strided_slice %66 {offsets = [0, 128], sizes = [8, 128], strides = [1, 1]} : vector<8x384xf32> to vector<8x128xf32>
    %69 = vector.extract_strided_slice %66 {offsets = [0, 256], sizes = [8, 128], strides = [1, 1]} : vector<8x384xf32> to vector<8x128xf32>
    %cst_38 = arith.constant dense<0.000000e+00> : vector<8xf32>
    %70 = vector.multi_reduction <add>, %59, %cst_38 [1] : vector<8x128xf32> to vector<8xf32>
    %71 = vector.shape_cast %70 : vector<8xf32> to vector<8x1xf32>
    %72 = arith.mulf %59, %59 : vector<8x128xf32>
    %cst_39 = arith.constant dense<0.000000e+00> : vector<8xf32>
    %73 = vector.multi_reduction <add>, %72, %cst_39 [1] : vector<8x128xf32> to vector<8xf32>
    %74 = vector.shape_cast %73 : vector<8xf32> to vector<8x1xf32>
    %cst_40 = arith.constant 3.125000e-02 : f32
    %75 = vector.broadcast %cst_40 : f32 to vector<8x1xf32>
    %76 = arith.mulf %71, %75 : vector<8x1xf32>
    %cst_41 = arith.constant 3.125000e-02 : f32
    %77 = vector.broadcast %cst_41 : f32 to vector<8x1xf32>
    %78 = arith.mulf %74, %77 : vector<8x1xf32>
    %79 = arith.mulf %76, %76 : vector<8x1xf32>
    %80 = arith.subf %78, %79 : vector<8x1xf32>
    %cst_42 = arith.constant 0.000000e+00 : f32
    %81 = vector.broadcast %cst_42 : f32 to vector<8x1xf32>
    %82 = arith.maximumf %80, %81 : vector<8x1xf32>
    %83 = vector.broadcast %76 : vector<8x1xf32> to vector<8x128xf32>
    %84 = arith.subf %59, %83 : vector<8x128xf32>
    %cst_43 = arith.constant 9.99999997E-7 : f32
    %85 = vector.broadcast %cst_43 : f32 to vector<8x1xf32>
    %86 = arith.addf %82, %85 : vector<8x1xf32>
    %87 = math.rsqrt %86 : vector<8x1xf32>
    %88 = vector.broadcast %87 : vector<8x1xf32> to vector<8x128xf32>
    %89 = arith.mulf %84, %88 : vector<8x128xf32>
    %cst_44 = arith.constant 1.000000e+00 : f32
    %90 = vector.broadcast %cst_44 : f32 to vector<8x128xf32>
    %91 = arith.addf %90, %68 : vector<8x128xf32>
    %92 = arith.mulf %89, %91 : vector<8x128xf32>
    %93 = arith.addf %92, %67 : vector<8x128xf32>
    %c1_45 = arith.constant 1 : index
    %c0_46 = arith.constant 0 : index
    %c0_47 = arith.constant 0 : index
    %94 = vector.load %arg5[%c1_45, %c0_46, %c0_47] : memref<2x128x128xf32, #tpu.memory_space<vmem>>, vector<1x128x128xf32>
    %95 = vector.shape_cast %94 : vector<1x128x128xf32> to vector<128x128xf32>
    %cst_48 = arith.constant dense<0.000000e+00> : vector<8x128xf32>
    %96 = tpu.matmul %93, %95, %cst_48 {dimension_numbers = #tpu.dot_dimension_numbers<[1], [0], [0], [1], [0, 0, 1, 1], [], []>} : vector<8x128xf32>, vector<128x128xf32>, vector<8x128xf32> -> vector<8x128xf32>
    %c1_49 = arith.constant 1 : index
    %c0_50 = arith.constant 0 : index
    %c0_51 = arith.constant 0 : index
    %97 = vector.load %arg6[%c1_49, %c0_50, %c0_51] : memref<2x1x128xf32, #tpu.memory_space<vmem>>, vector<1x1x128xf32>
    %98 = vector.shape_cast %97 : vector<1x1x128xf32> to vector<1x128xf32>
    %99 = vector.broadcast %98 : vector<1x128xf32> to vector<8x128xf32>
    %100 = arith.addf %96, %99 : vector<8x128xf32>
    %cst_52 = arith.constant 0.000000e+00 : f32
    %101 = vector.broadcast %cst_52 : f32 to vector<8x128xf32>
    %102 = arith.maximumf %100, %101 : vector<8x128xf32>
    %c1_53 = arith.constant 1 : index
    %c0_54 = arith.constant 0 : index
    %c0_55 = arith.constant 0 : index
    %103 = vector.load %arg7[%c1_53, %c0_54, %c0_55] : memref<2x128x128xf32, #tpu.memory_space<vmem>>, vector<1x128x128xf32>
    %104 = vector.shape_cast %103 : vector<1x128x128xf32> to vector<128x128xf32>
    %cst_56 = arith.constant dense<0.000000e+00> : vector<8x128xf32>
    %105 = tpu.matmul %102, %104, %cst_56 {dimension_numbers = #tpu.dot_dimension_numbers<[1], [0], [0], [1], [0, 0, 1, 1], [], []>} : vector<8x128xf32>, vector<128x128xf32>, vector<8x128xf32> -> vector<8x128xf32>
    %c1_57 = arith.constant 1 : index
    %c0_58 = arith.constant 0 : index
    %c0_59 = arith.constant 0 : index
    %106 = vector.load %arg8[%c1_57, %c0_58, %c0_59] : memref<2x1x128xf32, #tpu.memory_space<vmem>>, vector<1x1x128xf32>
    %107 = vector.shape_cast %106 : vector<1x1x128xf32> to vector<1x128xf32>
    %108 = vector.broadcast %107 : vector<1x128xf32> to vector<8x128xf32>
    %109 = arith.addf %105, %108 : vector<8x128xf32>
    %110 = arith.mulf %69, %109 : vector<8x128xf32>
    %111 = arith.addf %59, %110 : vector<8x128xf32>
    %c0_60 = arith.constant 0 : index
    %c0_61 = arith.constant 0 : index
    %112 = vector.load %arg9[%c0_60, %c0_61] : memref<8x128xf32, #tpu.memory_space<vmem>>, vector<8x128xf32>
    tpu.vector_store %arg9[%c0_60, %c0_61], %111 {strides = array<i32>} : memref<8x128xf32, #tpu.memory_space<vmem>>, vector<8x128xf32>,
    return
  }
  func.func @transform_0(%arg0: i32) -> (i32, i32) {
    %c0_i32 = arith.constant 0 : i32
    %c0_i32_0 = arith.constant 0 : i32
    return %arg0, %c0_i32 : i32, i32
  }
  func.func @transform_1(%arg0: i32) -> (i32, i32) {
    %c0_i32 = arith.constant 0 : i32
    %c0_i32_0 = arith.constant 0 : i32
    return %arg0, %c0_i32 : i32, i32
  }
  func.func @transform_2(%arg0: i32) -> (i32, i32, i32) {
    %c0_i32 = arith.constant 0 : i32
    %c0_i32_0 = arith.constant 0 : i32
    %c0_i32_1 = arith.constant 0 : i32
    %c0_i32_2 = arith.constant 0 : i32
    return %c0_i32, %c0_i32_0, %c0_i32_1 : i32, i32, i32
  }
  func.func @transform_3(%arg0: i32) -> (i32, i32, i32) {
    %c0_i32 = arith.constant 0 : i32
    %c0_i32_0 = arith.constant 0 : i32
    %c0_i32_1 = arith.constant 0 : i32
    %c0_i32_2 = arith.constant 0 : i32
    return %c0_i32, %c0_i32_0, %c0_i32_1 : i32, i32, i32
  }
  func.func @transform_4(%arg0: i32) -> (i32, i32, i32) {
    %c0_i32 = arith.constant 0 : i32
    %c0_i32_0 = arith.constant 0 : i32
    %c0_i32_1 = arith.constant 0 : i32
    %c0_i32_2 = arith.constant 0 : i32
    return %c0_i32, %c0_i32_0, %c0_i32_1 : i32, i32, i32
  }
  func.func @transform_5(%arg0: i32) -> (i32, i32, i32) {
    %c0_i32 = arith.constant 0 : i32
    %c0_i32_0 = arith.constant 0 : i32
    %c0_i32_1 = arith.constant 0 : i32
    %c0_i32_2 = arith.constant 0 : i32
    return %c0_i32, %c0_i32_0, %c0_i32_1 : i32, i32, i32
  }
  func.func @transform_6(%arg0: i32) -> (i32, i32, i32) {
    %c0_i32 = arith.constant 0 : i32
    %c0_i32_0 = arith.constant 0 : i32
    %c0_i32_1 = arith.constant 0 : i32
    %c0_i32_2 = arith.constant 0 : i32
    return %c0_i32, %c0_i32_0, %c0_i32_1 : i32, i32, i32
  }
  func.func @transform_7(%arg0: i32) -> (i32, i32, i32) {
    %c0_i32 = arith.constant 0 : i32
    %c0_i32_0 = arith.constant 0 : i32
    %c0_i32_1 = arith.constant 0 : i32
    %c0_i32_2 = arith.constant 0 : i32
    return %c0_i32, %c0_i32_0, %c0_i32_1 : i32, i32, i32
  }
  func.func @transform_8(%arg0: i32) -> (i32, i32) {
    %c0_i32 = arith.constant 0 : i32
    %c0_i32_0 = arith.constant 0 : i32
    return %arg0, %c0_i32 : i32, i32
  }
}

module attributes {stable_mosaic.version = 11 : i64} {
  func.func @diffmlp_kernel(%arg0: i32, %arg1: memref<8x128xf32, #tpu.memory_space<vmem>>, %arg2: memref<8x128xf32, #tpu.memory_space<vmem>>, %arg3: memref<2x128x384xf32, #tpu.memory_space<vmem>>, %arg4: memref<2x1x384xf32, #tpu.memory_space<vmem>>, %arg5: memref<2x128x128xf32, #tpu.memory_space<vmem>>, %arg6: memref<2x1x128xf32, #tpu.memory_space<vmem>>, %arg7: memref<2x128x128xf32, #tpu.memory_space<vmem>>, %arg8: memref<2x1x128xf32, #tpu.memory_space<vmem>>, %arg9: memref<8x128xf32, #tpu.memory_space<vmem>>) attributes {dimension_semantics = [#tpu.dimension_semantics<parallel>], iteration_bounds = array<i64: 2>, scalar_prefetch = 0 : i64, scratch_operands = 0 : i64, tpu.core_type = #tpu.core_type<tc>, window_params = [{transform_indices = @transform_0, window_bounds = array<i64: 8, 128>}, {transform_indices = @transform_1, window_bounds = array<i64: 8, 128>}, {pipeline_mode = #tpu.pipeline_mode<synchronous>, transform_indices = @transform_2, window_bounds = array<i64: 2, 128, 384>}, {pipeline_mode = #tpu.pipeline_mode<synchronous>, transform_indices = @transform_3, window_bounds = array<i64: 2, 1, 384>}, {pipeline_mode = #tpu.pipeline_mode<synchronous>, transform_indices = @transform_4, window_bounds = array<i64: 2, 128, 128>}, {pipeline_mode = #tpu.pipeline_mode<synchronous>, transform_indices = @transform_5, window_bounds = array<i64: 2, 1, 128>}, {pipeline_mode = #tpu.pipeline_mode<synchronous>, transform_indices = @transform_6, window_bounds = array<i64: 2, 128, 128>}, {pipeline_mode = #tpu.pipeline_mode<synchronous>, transform_indices = @transform_7, window_bounds = array<i64: 2, 1, 128>}, {transform_indices = @transform_8, window_bounds = array<i64: 8, 128>}]} {
    %c0 = arith.constant 0 : index
    %c0_0 = arith.constant 0 : index
    %0 = vector.load %arg1[%c0, %c0_0] : memref<8x128xf32, #tpu.memory_space<vmem>>, vector<8x128xf32>
    %c0_1 = arith.constant 0 : index
    %c0_2 = arith.constant 0 : index
    %1 = vector.load %arg2[%c0_1, %c0_2] : memref<8x128xf32, #tpu.memory_space<vmem>>, vector<8x128xf32>
    %2 = arith.negf %1 : vector<8x128xf32>
    %3 = math.exp %2 : vector<8x128xf32>
    %cst = arith.constant 1.000000e+00 : f32
    %4 = vector.broadcast %cst : f32 to vector<8x128xf32>
    %5 = arith.addf %4, %3 : vector<8x128xf32>
    %6 = arith.divf %4, %5 : vector<8x128xf32>
    %7 = arith.mulf %1, %6 : vector<8x128xf32>
    %c0_3 = arith.constant 0 : index
    %c0_4 = arith.constant 0 : index
    %c0_5 = arith.constant 0 : index
    %8 = vector.load %arg3[%c0_3, %c0_4, %c0_5] : memref<2x128x384xf32, #tpu.memory_space<vmem>>, vector<1x128x384xf32>
    %9 = vector.shape_cast %8 : vector<1x128x384xf32> to vector<128x384xf32>
    %cst_6 = arith.constant dense<0.000000e+00> : vector<8x384xf32>
    %10 = tpu.matmul %7, %9, %cst_6 {dimension_numbers = #tpu.dot_dimension_numbers<[1], [0], [0], [1], [0, 0, 1, 1], [], []>} : vector<8x128xf32>, vector<128x384xf32>, vector<8x384xf32> -> vector<8x384xf32>
    %c0_7 = arith.constant 0 : index
    %c0_8 = arith.constant 0 : index
    %c0_9 = arith.constant 0 : index
    %11 = vector.load %arg4[%c0_7, %c0_8, %c0_9] : memref<2x1x384xf32, #tpu.memory_space<vmem>>, vector<1x1x384xf32>
    %12 = vector.shape_cast %11 : vector<1x1x384xf32> to vector<1x384xf32>
    %13 = vector.broadcast %12 : vector<1x384xf32> to vector<8x384xf32>
    %14 = arith.addf %10, %13 : vector<8x384xf32>
    %15 = vector.extract_strided_slice %14 {offsets = [0, 0], sizes = [8, 128], strides = [1, 1]} : vector<8x384xf32> to vector<8x128xf32>
    %16 = vector.extract_strided_slice %14 {offsets = [0, 128], sizes = [8, 128], strides = [1, 1]} : vector<8x384xf32> to vector<8x128xf32>
    %17 = vector.extract_strided_slice %14 {offsets = [0, 256], sizes = [8, 128], strides = [1, 1]} : vector<8x384xf32> to vector<8x128xf32>
    %cst_10 = arith.constant dense<0.000000e+00> : vector<8xf32>
    %18 = vector.multi_reduction <add>, %0, %cst_10 [1] : vector<8x128xf32> to vector<8xf32>
    %19 = vector.shape_cast %18 : vector<8xf32> to vector<8x1xf32>
    %20 = arith.mulf %0, %0 : vector<8x128xf32>
    %cst_11 = arith.constant dense<0.000000e+00> : vector<8xf32>
    %21 = vector.multi_reduction <add>, %20, %cst_11 [1] : vector<8x128xf32> to vector<8xf32>
    %22 = vector.shape_cast %21 : vector<8xf32> to vector<8x1xf32>
    %cst_12 = arith.constant 3.125000e-02 : f32
    %23 = vector.broadcast %cst_12 : f32 to vector<8x1xf32>
    %24 = arith.mulf %19, %23 : vector<8x1xf32>
    %cst_13 = arith.constant 3.125000e-02 : f32
    %25 = vector.broadcast %cst_13 : f32 to vector<8x1xf32>
    %26 = arith.mulf %22, %25 : vector<8x1xf32>
    %27 = arith.mulf %24, %24 : vector<8x1xf32>
    %28 = arith.subf %26, %27 : vector<8x1xf32>
    %cst_14 = arith.constant 0.000000e+00 : f32
    %29 = vector.broadcast %cst_14 : f32 to vector<8x1xf32>
    %30 = arith.maximumf %28, %29 : vector<8x1xf32>
    %31 = vector.broadcast %24 : vector<8x1xf32> to vector<8x128xf32>
    %32 = arith.subf %0, %31 : vector<8x128xf32>
    %cst_15 = arith.constant 9.99999997E-7 : f32
    %33 = vector.broadcast %cst_15 : f32 to vector<8x1xf32>
    %34 = arith.addf %30, %33 : vector<8x1xf32>
    %35 = math.rsqrt %34 : vector<8x1xf32>
    %36 = vector.broadcast %35 : vector<8x1xf32> to vector<8x128xf32>
    %37 = arith.mulf %32, %36 : vector<8x128xf32>
    %cst_16 = arith.constant 1.000000e+00 : f32
    %38 = vector.broadcast %cst_16 : f32 to vector<8x128xf32>
    %39 = arith.addf %38, %16 : vector<8x128xf32>
    %40 = arith.mulf %37, %39 : vector<8x128xf32>
    %41 = arith.addf %40, %15 : vector<8x128xf32>
    %c0_17 = arith.constant 0 : index
    %c0_18 = arith.constant 0 : index
    %c0_19 = arith.constant 0 : index
    %42 = vector.load %arg5[%c0_17, %c0_18, %c0_19] : memref<2x128x128xf32, #tpu.memory_space<vmem>>, vector<1x128x128xf32>
    %43 = vector.shape_cast %42 : vector<1x128x128xf32> to vector<128x128xf32>
    %cst_20 = arith.constant dense<0.000000e+00> : vector<8x128xf32>
    %44 = tpu.matmul %41, %43, %cst_20 {dimension_numbers = #tpu.dot_dimension_numbers<[1], [0], [0], [1], [0, 0, 1, 1], [], []>} : vector<8x128xf32>, vector<128x128xf32>, vector<8x128xf32> -> vector<8x128xf32>
    %c0_21 = arith.constant 0 : index
    %c0_22 = arith.constant 0 : index
    %c0_23 = arith.constant 0 : index
    %45 = vector.load %arg6[%c0_21, %c0_22, %c0_23] : memref<2x1x128xf32, #tpu.memory_space<vmem>>, vector<1x1x128xf32>
    %46 = vector.shape_cast %45 : vector<1x1x128xf32> to vector<1x128xf32>
    %47 = vector.broadcast %46 : vector<1x128xf32> to vector<8x128xf32>
    %48 = arith.addf %44, %47 : vector<8x128xf32>
    %cst_24 = arith.constant 0.000000e+00 : f32
    %49 = vector.broadcast %cst_24 : f32 to vector<8x128xf32>
    %50 = arith.maximumf %48, %49 : vector<8x128xf32>
    %c0_25 = arith.constant 0 : index
    %c0_26 = arith.constant 0 : index
    %c0_27 = arith.constant 0 : index
    %51 = vector.load %arg7[%c0_25, %c0_26, %c0_27] : memref<2x128x128xf32, #tpu.memory_space<vmem>>, vector<1x128x128xf32>
    %52 = vector.shape_cast %51 : vector<1x128x128xf32> to vector<128x128xf32>
    %cst_28 = arith.constant dense<0.000000e+00> : vector<8x128xf32>
    %53 = tpu.matmul %50, %52, %cst_28 {dimension_numbers = #tpu.dot_dimension_numbers<[1], [0], [0], [1], [0, 0, 1, 1], [], []>} : vector<8x128xf32>, vector<128x128xf32>, vector<8x128xf32> -> vector<8x128xf32>
    %c0_29 = arith.constant 0 : index
    %c0_30 = arith.constant 0 : index
    %c0_31 = arith.constant 0 : index
    %54 = vector.load %arg8[%c0_29, %c0_30, %c0_31] : memref<2x1x128xf32, #tpu.memory_space<vmem>>, vector<1x1x128xf32>
    %55 = vector.shape_cast %54 : vector<1x1x128xf32> to vector<1x128xf32>
    %56 = vector.broadcast %55 : vector<1x128xf32> to vector<8x128xf32>
    %57 = arith.addf %53, %56 : vector<8x128xf32>
    %58 = arith.mulf %17, %57 : vector<8x128xf32>
    %59 = arith.addf %0, %58 : vector<8x128xf32>
    %c1 = arith.constant 1 : index
    %c0_32 = arith.constant 0 : index
    %c0_33 = arith.constant 0 : index
    %60 = vector.load %arg3[%c1, %c0_32, %c0_33] : memref<2x128x384xf32, #tpu.memory_space<vmem>>, vector<1x128x384xf32>
    %61 = vector.shape_cast %60 : vector<1x128x384xf32> to vector<128x384xf32>
    %cst_34 = arith.constant dense<0.000000e+00> : vector<8x384xf32>
    %62 = tpu.matmul %7, %61, %cst_34 {dimension_numbers = #tpu.dot_dimension_numbers<[1], [0], [0], [1], [0, 0, 1, 1], [], []>} : vector<8x128xf32>, vector<128x384xf32>, vector<8x384xf32> -> vector<8x384xf32>
    %c1_35 = arith.constant 1 : index
    %c0_36 = arith.constant 0 : index
    %c0_37 = arith.constant 0 : index
    %63 = vector.load %arg4[%c1_35, %c0_36, %c0_37] : memref<2x1x384xf32, #tpu.memory_space<vmem>>, vector<1x1x384xf32>
    %64 = vector.shape_cast %63 : vector<1x1x384xf32> to vector<1x384xf32>
    %65 = vector.broadcast %64 : vector<1x384xf32> to vector<8x384xf32>
    %66 = arith.addf %62, %65 : vector<8x384xf32>
    %67 = vector.extract_strided_slice %66 {offsets = [0, 0], sizes = [8, 128], strides = [1, 1]} : vector<8x384xf32> to vector<8x128xf32>
    %68 = vector.extract_strided_slice %66 {offsets = [0, 128], sizes = [8, 128], strides = [1, 1]} : vector<8x384xf32> to vector<8x128xf32>
    %69 = vector.extract_strided_slice %66 {offsets = [0, 256], sizes = [8, 128], strides = [1, 1]} : vector<8x384xf32> to vector<8x128xf32>
    %cst_38 = arith.constant dense<0.000000e+00> : vector<8xf32>
    %70 = vector.multi_reduction <add>, %59, %cst_38 [1] : vector<8x128xf32> to vector<8xf32>
    %71 = vector.shape_cast %70 : vector<8xf32> to vector<8x1xf32>
    %72 = arith.mulf %59, %59 : vector<8x128xf32>
    %cst_39 = arith.constant dense<0.000000e+00> : vector<8xf32>
    %73 = vector.multi_reduction <add>, %72, %cst_39 [1] : vector<8x128xf32> to vector<8xf32>
    %74 = vector.shape_cast %73 : vector<8xf32> to vector<8x1xf32>
    %cst_40 = arith.constant 3.125000e-02 : f32
    %75 = vector.broadcast %cst_40 : f32 to vector<8x1xf32>
    %76 = arith.mulf %71, %75 : vector<8x1xf32>
    %cst_41 = arith.constant 3.125000e-02 : f32
    %77 = vector.broadcast %cst_41 : f32 to vector<8x1xf32>
    %78 = arith.mulf %74, %77 : vector<8x1xf32>
    %79 = arith.mulf %76, %76 : vector<8x1xf32>
    %80 = arith.subf %78, %79 : vector<8x1xf32>
    %cst_42 = arith.constant 0.000000e+00 : f32
    %81 = vector.broadcast %cst_42 : f32 to vector<8x1xf32>
    %82 = arith.maximumf %80, %81 : vector<8x1xf32>
    %83 = vector.broadcast %76 : vector<8x1xf32> to vector<8x128xf32>
    %84 = arith.subf %59, %83 : vector<8x128xf32>
    %cst_43 = arith.constant 9.99999997E-7 : f32
    %85 = vector.broadcast %cst_43 : f32 to vector<8x1xf32>
    %86 = arith.addf %82, %85 : vector<8x1xf32>
    %87 = math.rsqrt %86 : vector<8x1xf32>
    %88 = vector.broadcast %87 : vector<8x1xf32> to vector<8x128xf32>
    %89 = arith.mulf %84, %88 : vector<8x128xf32>
    %cst_44 = arith.constant 1.000000e+00 : f32
    %90 = vector.broadcast %cst_44 : f32 to vector<8x128xf32>
    %91 = arith.addf %90, %68 : vector<8x128xf32>
    %92 = arith.mulf %89, %91 : vector<8x128xf32>
    %93 = arith.addf %92, %67 : vector<8x128xf32>
    %c1_45 = arith.constant 1 : index
    %c0_46 = arith.constant 0 : index
    %c0_47 = arith.constant 0 : index
    %94 = vector.load %arg5[%c1_45, %c0_46, %c0_47] : memref<2x128x128xf32, #tpu.memory_space<vmem>>, vector<1x128x128xf32>
    %95 = vector.shape_cast %94 : vector<1x128x128xf32> to vector<128x128xf32>
    %cst_48 = arith.constant dense<0.000000e+00> : vector<8x128xf32>
    %96 = tpu.matmul %93, %95, %cst_48 {dimension_numbers = #tpu.dot_dimension_numbers<[1], [0], [0], [1], [0, 0, 1, 1], [], []>} : vector<8x128xf32>, vector<128x128xf32>, vector<8x128xf32> -> vector<8x128xf32>
    %c1_49 = arith.constant 1 : index
    %c0_50 = arith.constant 0 : index
    %c0_51 = arith.constant 0 : index
    %97 = vector.load %arg6[%c1_49, %c0_50, %c0_51] : memref<2x1x128xf32, #tpu.memory_space<vmem>>, vector<1x1x128xf32>
    %98 = vector.shape_cast %97 : vector<1x1x128xf32> to vector<1x128xf32>
    %99 = vector.broadcast %98 : vector<1x128xf32> to vector<8x128xf32>
    %100 = arith.addf %96, %99 : vector<8x128xf32>
    %cst_52 = arith.constant 0.000000e+00 : f32
    %101 = vector.broadcast %cst_52 : f32 to vector<8x128xf32>
    %102 = arith.maximumf %100, %101 : vector<8x128xf32>
    %c1_53 = arith.constant 1 : index
    %c0_54 = arith.constant 0 : index
    %c0_55 = arith.constant 0 : index
    %103 = vector.load %arg7[%c1_53, %c0_54, %c0_55] : memref<2x128x128xf32, #tpu.memory_space<vmem>>, vector<1x128x128xf32>
    %104 = vector.shape_cast %103 : vector<1x128x128xf32> to vector<128x128xf32>
    %cst_56 = arith.constant dense<0.000000e+00> : vector<8x128xf32>
    %105 = tpu.matmul %102, %104, %cst_56 {dimension_numbers = #tpu.dot_dimension_numbers<[1], [0], [0], [1], [0, 0, 1, 1], [], []>} : vector<8x128xf32>, vector<128x128xf32>, vector<8x128xf32> -> vector<8x128xf32>
    %c1_57 = arith.constant 1 : index
    %c0_58 = arith.constant 0 : index
    %c0_59 = arith.constant 0 : index
    %106 = vector.load %arg8[%c1_57, %c0_58, %c0_59] : memref<2x1x128xf32, #tpu.memory_space<vmem>>, vector<1x1x128xf32>
    %107 = vector.shape_cast %106 : vector<1x1x128xf32> to vector<1x128xf32>
    %108 = vector.broadcast %107 : vector<1x128xf32> to vector<8x128xf32>
    %109 = arith.addf %105, %108 : vector<8x128xf32>
    %110 = arith.mulf %69, %109 : vector<8x128xf32>
    %111 = arith.addf %59, %110 : vector<8x128xf32>
    %c0_60 = arith.constant 0 : index
    %c0_61 = arith.constant 0 : index
    %112 = vector.load %arg9[%c0_60, %c0_61] : memref<8x128xf32, #tpu.memory_space<vmem>>, vector<8x128xf32>
    tpu.vector_store %arg9[%c0_60, %c0_61], %111 {strides = array<i32>} : memref<8x128xf32, #tpu.memory_space<vmem>>, vector<8x128xf32>,
    return
  }
  func.func @transform_0(%arg0: i32) -> (i32, i32) {
    %c0_i32 = arith.constant 0 : i32
    %c0_i32_0 = arith.constant 0 : i32
    return %arg0, %c0_i32 : i32, i32
  }
  func.func @transform_1(%arg0: i32) -> (i32, i32) {
    %c0_i32 = arith.constant 0 : i32
    %c0_i32_0 = arith.constant 0 : i32
    return %arg0, %c0_i32 : i32, i32
  }
  func.func @transform_2(%arg0: i32) -> (i32, i32, i32) {
    %c0_i32 = arith.constant 0 : i32
    %c0_i32_0 = arith.constant 0 : i32
    %c0_i32_1 = arith.constant 0 : i32
    %c0_i32_2 = arith.constant 0 : i32
    return %c0_i32, %c0_i32_0, %c0_i32_1 : i32, i32, i32
  }
  func.func @transform_3(%arg0: i32) -> (i32, i32, i32) {
    %c0_i32 = arith.constant 0 : i32
    %c0_i32_0 = arith.constant 0 : i32
    %c0_i32_1 = arith.constant 0 : i32
    %c0_i32_2 = arith.constant 0 : i32
    return %c0_i32, %c0_i32_0, %c0_i32_1 : i32, i32, i32
  }
  func.func @transform_4(%arg0: i32) -> (i32, i32, i32) {
    %c0_i32 = arith.constant 0 : i32
    %c0_i32_0 = arith.constant 0 : i32
    %c0_i32_1 = arith.constant 0 : i32
    %c0_i32_2 = arith.constant 0 : i32
    return %c0_i32, %c0_i32_0, %c0_i32_1 : i32, i32, i32
  }
  func.func @transform_5(%arg0: i32) -> (i32, i32, i32) {
    %c0_i32 = arith.constant 0 : i32
    %c0_i32_0 = arith.constant 0 : i32
    %c0_i32_1 = arith.constant 0 : i32
    %c0_i32_2 = arith.constant 0 : i32
    return %c0_i32, %c0_i32_0, %c0_i32_1 : i32, i32, i32
  }
  func.func @transform_6(%arg0: i32) -> (i32, i32, i32) {
    %c0_i32 = arith.constant 0 : i32
    %c0_i32_0 = arith.constant 0 : i32
    %c0_i32_1 = arith.constant 0 : i32
    %c0_i32_2 = arith.constant 0 : i32
    return %c0_i32, %c0_i32_0, %c0_i32_1 : i32, i32, i32
  }
  func.func @transform_7(%arg0: i32) -> (i32, i32, i32) {
    %c0_i32 = arith.constant 0 : i32
    %c0_i32_0 = arith.constant 0 : i32
    %c0_i32_1 = arith.constant 0 : i32
    %c0_i32_2 = arith.constant 0 : i32
    return %c0_i32, %c0_i32_0, %c0_i32_1 : i32, i32, i32
  }
  func.func @transform_8(%arg0: i32) -> (i32, i32) {
    %c0_i32 = arith.constant 0 : i32
    %c0_i32_0 = arith.constant 0 : i32
    return %arg0, %c0_i32 : i32, i32
  }
}

</mosaic_0001>

<llo_original>
// kernel: tpu_custom_call.1
$region0: #{tpu_custom_call.1}
  #allocation0 [shape = 'u32[]', space=smem, size = 0x4, offset = 0x4, fixed_abs, tag = 'smem constant byte address 0x4 - core index']
  #allocation1 [shape = 'u32[72,128]{1,0:T(1,128)}', space=vmem, size = 0x9000, scoped, tag = 'internal scratch']
  %s0 = inlined_call_operand.hbm [shape: f32[16,128], index: 0, kind: input, shape index: {}]
  %s1 = inlined_call_operand.hbm [shape: f32[16,128], index: 1, kind: input, shape index: {}]
  %s2 = inlined_call_operand.hbm [shape: f32[2,128,384], index: 2, kind: input, shape index: {}]
  %s3 = inlined_call_operand.hbm [shape: f32[2,1,384], index: 3, kind: input, shape index: {}]
  %s4 = inlined_call_operand.hbm [shape: f32[2,128,128], index: 4, kind: input, shape index: {}]
  %s5 = inlined_call_operand.vmem [shape: f32[2,1,128], index: 5, kind: input, shape index: {}]
  %s6 = inlined_call_operand.hbm [shape: f32[2,128,128], index: 6, kind: input, shape index: {}]
  %s7 = inlined_call_operand.vmem [shape: f32[2,1,128], index: 7, kind: input, shape index: {}]
  %s8 = inlined_call_operand.hbm [shape: f32[16,128], index: 8, kind: output, shape index: {}]
  %s9 = sld [smem:[#allocation0]]
  $region89: #{tpu_custom_call.1} parent=0
    _
  %s11 = ssub.s32 1, %s9
  %s12 = scalar_select 0, %s11, %s9
  $region1: #{tpu_custom_call.1} parent=0
    #allocation2 [shape = 'u8[8192]{0}', space=vmem, size = 0x2000, scoped, tag = 'input window, operand 0']
    #allocation3 [shape = 's32[2]{0}', space=sflag, size = 0x8, scoped, tag = 'scoped memory for tpu_custom_call.1']
    #allocation4 [shape = 's32[2]{0}', space=sflag, size = 0x8, scoped, tag = 'scoped memory for tpu_custom_call.1']
    #allocation5 [shape = 'u8[8192]{0}', space=vmem, size = 0x2000, scoped, tag = 'input window, operand 1']
    #allocation6 [shape = 's32[2]{0}', space=sflag, size = 0x8, scoped, tag = 'scoped memory for tpu_custom_call.1']
    #allocation7 [shape = 'u8[393216]{0}', space=vmem, size = 0x60000, scoped, tag = 'input window, operand 2, single buffered']
    #allocation8 [shape = 'u8[3072]{0}', space=vmem, size = 0xc00, scoped, tag = 'input window, operand 3, single buffered']
    #allocation9 [shape = 's32[1]{0}', space=sflag, size = 0x4, scoped, tag = 'scoped memory for tpu_custom_call.1']
    #allocation10 [shape = 'u8[131072]{0}', space=vmem, size = 0x20000, scoped, tag = 'input window, operand 4, single buffered']
    #allocation11 [shape = 'u8[131072]{0}', space=vmem, size = 0x20000, scoped, tag = 'input window, operand 6, single buffered']
    #allocation12 [shape = 's32[1]{0}', space=sflag, size = 0x4, scoped, tag = 'scoped memory for tpu_custom_call.1']
    #allocation13 [shape = 'u8[8192]{0}', space=vmem, size = 0x2000, scoped, tag = 'output window, operand 0']
    %13 = vsyncpa [#allocation3], 0
    %s14 = scalar_lea.sflag [#allocation3], 1
    %15 = vsyncpa %s14, 0
    %16 = vsyncpa [#allocation6], 0
    %s17 = scalar_lea.sflag [#allocation6], 1
    %18 = vsyncpa %s17, 0
    %19 = vsyncpa [#allocation9], 0
    %20 = vsyncpa [#allocation12], 0
    %21 = vsyncpa [#allocation4], 0
    %s22 = scalar_lea.sflag [#allocation4], 1
    %23 = vsyncpa %s22, 0
    loop: start=0, step=1, limit=4
    $region2: #{tpu_custom_call.1} parent=1 // loop_pre_header
      _
    $region3: #{tpu_custom_call.1} parent=1 // loop_header
      %s25 = sphi 0, %s29
      %p26 = scmp.ge.s32.totalorder %s25, 4
      %s35 = sphi 0, %s37
      %s38 = sphi 0, %s35
      %s39 = sphi 0, %s38
      %s55 = sphi 0, %s39
      %s61 = sphi 0, %s63
      %s64 = sphi 0, %s61
      %s65 = sphi 0, %s64
      %s81 = sphi 0, %s65
      %s85 = sphi 0, %s85
      %s87 = sphi 0, %s85
      %s88 = sphi 0, %s87
      %s102 = sphi 0, %s88
      %s106 = sphi 0, %s106
      %s108 = sphi 0, %s106
      %s109 = sphi 0, %s108
      %s123 = sphi 0, %s109
      %s127 = sphi 0, %s127
      %s129 = sphi 0, %s127
      %s130 = sphi 0, %s129
      %s144 = sphi 0, %s130
      %s148 = sphi 0, %s148
      %s150 = sphi 0, %s148
      %s151 = sphi 0, %s150
      %s165 = sphi 0, %s151
      %s169 = sphi 0, %s169
      %s171 = sphi 0, %s169
      %s172 = sphi 0, %s171
      %s186 = sphi 0, %s172
      %s190 = sphi 0, %s190
      %s192 = sphi 0, %s190
      %s193 = sphi 0, %s192
      %s207 = sphi 0, %s193
      %s213 = sphi 0, %s215
      %s216 = sphi 0, %s213
      %s217 = sphi 0, %s216
      %s233 = sphi 0, %s217
    $region4: #{tpu_custom_call.1} parent=1 // loop_header_branch
      %28 = sbr.rel (%p26) target = $region8
    $region5: #{tpu_custom_call.1} parent=1 // loop_body
      %s30 = ssub.s32 %s25, 1
      %s31 = ssub.s32 %s25, 2
      %s32 = sadd.s32 %s25, 1
      %s33 = ssub.s32 %s25, %s32
      %p34 = scmp.eq.s32.totalorder %s33, 0
      %s36 = sadd.s32 %s35, 1
      %s37 = scalar_select %p34, %s35, %s36
      %p40 = pneg %p34
      %p41 = scmp.eq.s32.totalorder %s25, 1
      %p42 = por %p40, %p41
      %p43 = scmp.ne.s32.totalorder %s35, %s38
      %p44 = scmp.eq.s32.totalorder %s25, 0
      %p45 = por %p43, %p44
      %p46 = scmp.ne.s32.totalorder %s35, %s38
      %p47 = scmp.eq.s32.totalorder %s30, 1
      %p48 = por %p46, %p47
      %p49 = scmp.ne.s32.totalorder %s38, %s39
      %p50 = scmp.eq.s32.totalorder %s30, 0
      %p51 = por %p49, %p50
      %p52 = scmp.ne.s32.totalorder %s38, %s39
      %p53 = scmp.eq.s32.totalorder %s31, 1
      %p54 = por %p52, %p53
      %p56 = scmp.ne.s32.totalorder %s39, %s55
      %p57 = scmp.eq.s32.totalorder %s31, 0
      %p58 = por %p56, %p57
      %s59 = ssub.s32 %s25, %s32
      %p60 = scmp.eq.s32.totalorder %s59, 0
      %s62 = sadd.s32 %s61, 1
      %s63 = scalar_select %p60, %s61, %s62
      %p66 = pneg %p60
      %p67 = scmp.eq.s32.totalorder %s25, 1
      %p68 = por %p66, %p67
      %p69 = scmp.ne.s32.totalorder %s61, %s64
      %p70 = scmp.eq.s32.totalorder %s25, 0
      %p71 = por %p69, %p70
      %p72 = scmp.ne.s32.totalorder %s61, %s64
      %p73 = scmp.eq.s32.totalorder %s30, 1
      %p74 = por %p72, %p73
      %p75 = scmp.ne.s32.totalorder %s64, %s65
      %p76 = scmp.eq.s32.totalorder %s30, 0
      %p77 = por %p75, %p76
      %p78 = scmp.ne.s32.totalorder %s64, %s65
      %p79 = scmp.eq.s32.totalorder %s31, 1
      %p80 = por %p78, %p79
      %p82 = scmp.ne.s32.totalorder %s65, %s81
      %p83 = scmp.eq.s32.totalorder %s31, 0
      %p84 = por %p82, %p83
      %s86 = sadd.s32 %s85, 1
      %p89 = scmp.eq.s32.totalorder %s25, 1
      %p90 = scmp.ne.s32.totalorder %s85, %s87
      %p91 = scmp.eq.s32.totalorder %s25, 0
      %p92 = por %p90, %p91
      %p93 = scmp.ne.s32.totalorder %s85, %s87
      %p94 = scmp.eq.s32.totalorder %s30, 1
      %p95 = por %p93, %p94
      %p96 = scmp.ne.s32.totalorder %s87, %s88
      %p97 = scmp.eq.s32.totalorder %s30, 0
      %p98 = por %p96, %p97
      %p99 = scmp.ne.s32.totalorder %s87, %s88
      %p100 = scmp.eq.s32.totalorder %s31, 1
      %p101 = por %p99, %p100
      %p103 = scmp.ne.s32.totalorder %s88, %s102
      %p104 = scmp.eq.s32.totalorder %s31, 0
      %p105 = por %p103, %p104
      %s107 = sadd.s32 %s106, 1
      %p110 = scmp.eq.s32.totalorder %s25, 1
      %p111 = scmp.ne.s32.totalorder %s106, %s108
      %p112 = scmp.eq.s32.totalorder %s25, 0
      %p113 = por %p111, %p112
      %p114 = scmp.ne.s32.totalorder %s106, %s108
      %p115 = scmp.eq.s32.totalorder %s30, 1
      %p116 = por %p114, %p115
      %p117 = scmp.ne.s32.totalorder %s108, %s109
      %p118 = scmp.eq.s32.totalorder %s30, 0
      %p119 = por %p117, %p118
      %p120 = scmp.ne.s32.totalorder %s108, %s109
      %p121 = scmp.eq.s32.totalorder %s31, 1
      %p122 = por %p120, %p121
      %p124 = scmp.ne.s32.totalorder %s109, %s123
      %p125 = scmp.eq.s32.totalorder %s31, 0
      %p126 = por %p124, %p125
      %s128 = sadd.s32 %s127, 1
      %p131 = scmp.eq.s32.totalorder %s25, 1
      %p132 = scmp.ne.s32.totalorder %s127, %s129
      %p133 = scmp.eq.s32.totalorder %s25, 0
      %p134 = por %p132, %p133
      %p135 = scmp.ne.s32.totalorder %s127, %s129
      %p136 = scmp.eq.s32.totalorder %s30, 1
      %p137 = por %p135, %p136
      %p138 = scmp.ne.s32.totalorder %s129, %s130
      %p139 = scmp.eq.s32.totalorder %s30, 0
      %p140 = por %p138, %p139
      %p141 = scmp.ne.s32.totalorder %s129, %s130
      %p142 = scmp.eq.s32.totalorder %s31, 1
      %p143 = por %p141, %p142
      %p145 = scmp.ne.s32.totalorder %s130, %s144
      %p146 = scmp.eq.s32.totalorder %s31, 0
      %p147 = por %p145, %p146
      %s149 = sadd.s32 %s148, 1
      %p152 = scmp.eq.s32.totalorder %s25, 1
      %p153 = scmp.ne.s32.totalorder %s148, %s150
      %p154 = scmp.eq.s32.totalorder %s25, 0
      %p155 = por %p153, %p154
      %p156 = scmp.ne.s32.totalorder %s148, %s150
      %p157 = scmp.eq.s32.totalorder %s30, 1
      %p158 = por %p156, %p157
      %p159 = scmp.ne.s32.totalorder %s150, %s151
      %p160 = scmp.eq.s32.totalorder %s30, 0
      %p161 = por %p159, %p160
      %p162 = scmp.ne.s32.totalorder %s150, %s151
      %p163 = scmp.eq.s32.totalorder %s31, 1
      %p164 = por %p162, %p163
      %p166 = scmp.ne.s32.totalorder %s151, %s165
      %p167 = scmp.eq.s32.totalorder %s31, 0
      %p168 = por %p166, %p167
      %s170 = sadd.s32 %s169, 1
      %p173 = scmp.eq.s32.totalorder %s25, 1
      %p174 = scmp.ne.s32.totalorder %s169, %s171
      %p175 = scmp.eq.s32.totalorder %s25, 0
      %p176 = por %p174, %p175
      %p177 = scmp.ne.s32.totalorder %s169, %s171
      %p178 = scmp.eq.s32.totalorder %s30, 1
      %p179 = por %p177, %p178
      %p180 = scmp.ne.s32.totalorder %s171, %s172
      %p181 = scmp.eq.s32.totalorder %s30, 0
      %p182 = por %p180, %p181
      %p183 = scmp.ne.s32.totalorder %s171, %s172
      %p184 = scmp.eq.s32.totalorder %s31, 1
      %p185 = por %p183, %p184
      %p187 = scmp.ne.s32.totalorder %s172, %s186
      %p188 = scmp.eq.s32.totalorder %s31, 0
      %p189 = por %p187, %p188
      %s191 = sadd.s32 %s190, 1
      %p194 = scmp.eq.s32.totalorder %s25, 1
      %p195 = scmp.ne.s32.totalorder %s190, %s192
      %p196 = scmp.eq.s32.totalorder %s25, 0
      %p197 = por %p195, %p196
      %p198 = scmp.ne.s32.totalorder %s190, %s192
      %p199 = scmp.eq.s32.totalorder %s30, 1
      %p200 = por %p198, %p199
      %p201 = scmp.ne.s32.totalorder %s192, %s193
      %p202 = scmp.eq.s32.totalorder %s30, 0
      %p203 = por %p201, %p202
      %p204 = scmp.ne.s32.totalorder %s192, %s193
      %p205 = scmp.eq.s32.totalorder %s31, 1
      %p206 = por %p204, %p205
      %p208 = scmp.ne.s32.totalorder %s193, %s207
      %p209 = scmp.eq.s32.totalorder %s31, 0
      %p210 = por %p208, %p209
      %s211 = ssub.s32 %s25, %s32
      %p212 = scmp.eq.s32.totalorder %s211, 0
      %s214 = sadd.s32 %s213, 1
      %s215 = scalar_select %p212, %s213, %s214
      %p218 = pneg %p212
      %p219 = scmp.eq.s32.totalorder %s25, 1
      %p220 = por %p218, %p219
      %p221 = scmp.ne.s32.totalorder %s213, %s216
      %p222 = scmp.eq.s32.totalorder %s25, 0
      %p223 = por %p221, %p222
      %p224 = scmp.ne.s32.totalorder %s213, %s216
      %p225 = scmp.eq.s32.totalorder %s30, 1
      %p226 = por %p224, %p225
      %p227 = scmp.ne.s32.totalorder %s216, %s217
      %p228 = scmp.eq.s32.totalorder %s30, 0
      %p229 = por %p227, %p228
      %p230 = scmp.ne.s32.totalorder %s216, %s217
      %p231 = scmp.eq.s32.totalorder %s31, 1
      %p232 = por %p230, %p231
      %p234 = scmp.ne.s32.totalorder %s217, %s233
      %p235 = scmp.eq.s32.totalorder %s31, 0
      %p236 = por %p234, %p235
      %p237 = scmp.le.s32.totalorder 1, %s25
      %p238 = scmp.lt.s32.totalorder %s25, 3
      %p239 = pnand %p237, %p238
      %p240 = pneg %p239
      // Predicated region
      $region9: #{tpu_custom_call.1} parent=5 // pred_check
        _
      $region10: #{tpu_custom_call.1} parent=5 // pred_check_branch
        %242 = sbr.rel (%p239) target = $region12
      $region11: #{tpu_custom_call.1} parent=5 // pred_region
        %s243 = ssub.s32 %s25, 1
        // Predicated region
        $region13: #{tpu_custom_call.1} parent=11 // pred_check
          %p244 = pneg %p98
        $region14: #{tpu_custom_call.1} parent=11 // pred_check_branch
          %246 = sbr.rel (%p244) target = $region16
        $region15: #{tpu_custom_call.1} parent=11 // pred_region
          %248 = vsyncadd [#allocation6], 0
          %s249 = sshll.u32 %s2, 4
          %s250 = int_to_ptr.hbm [resolvable:$true] %s249
          %s251 = sshll.u32 [#allocation7], 4
          %s252 = int_to_ptr.vmem [resolvable:$true] %s251
          %257 = dma.hbm_to_vmem [thread:$0]  %s250, 12288, %s252, [#allocation6], 384, 384, 24
        $region16: #{tpu_custom_call.1} parent=11 // pred_fallthru
          _
        // Predicated region
        $region17: #{tpu_custom_call.1} parent=11 // pred_check
          %p258 = pneg %p119
        $region18: #{tpu_custom_call.1} parent=11 // pred_check_branch
          %260 = sbr.rel (%p258) target = $region20
        $region19: #{tpu_custom_call.1} parent=11 // pred_region
          %262 = vsyncadd [#allocation9], 0
          %s263 = sshll.u32 %s3, 4
          %s264 = int_to_ptr.hbm [resolvable:$true] %s263
          %s265 = sshll.u32 [#allocation8], 4
          %s266 = int_to_ptr.vmem [resolvable:$true] %s265
          %271 = dma.hbm_to_vmem [thread:$0]  %s264, 96, %s266, [#allocation9], 48, 48, 3
        $region20: #{tpu_custom_call.1} parent=11 // pred_fallthru
          _
        // Predicated region
        $region21: #{tpu_custom_call.1} parent=11 // pred_check
          %p272 = pneg %p140
        $region22: #{tpu_custom_call.1} parent=11 // pred_check_branch
          %274 = sbr.rel (%p272) target = $region24
        $region23: #{tpu_custom_call.1} parent=11 // pred_region
          %276 = vsyncadd [#allocation9], 0
          %s277 = sshll.u32 %s4, 4
          %s278 = int_to_ptr.hbm [resolvable:$true] %s277
          %s279 = sshll.u32 [#allocation10], 4
          %s280 = int_to_ptr.vmem [resolvable:$true] %s279
          %285 = dma.hbm_to_vmem [thread:$0]  %s278, 4096, %s280, [#allocation9], 128, 128, 8
        $region24: #{tpu_custom_call.1} parent=11 // pred_fallthru
          _
        // Predicated region
        $region25: #{tpu_custom_call.1} parent=11 // pred_check
          %p286 = pneg %p161
        $region26: #{tpu_custom_call.1} parent=11 // pred_check_branch
          %288 = sbr.rel (%p286) target = $region28
        $region27: #{tpu_custom_call.1} parent=11 // pred_region
          _
        $region28: #{tpu_custom_call.1} parent=11 // pred_fallthru
          _
        // Predicated region
        $region29: #{tpu_custom_call.1} parent=11 // pred_check
          %p289 = pneg %p182
        $region30: #{tpu_custom_call.1} parent=11 // pred_check_branch
          %291 = sbr.rel (%p289) target = $region32
        $region31: #{tpu_custom_call.1} parent=11 // pred_region
          %293 = vsyncadd [#allocation12], 0
          %s294 = sshll.u32 %s6, 4
          %s295 = int_to_ptr.hbm [resolvable:$true] %s294
          %s296 = sshll.u32 [#allocation11], 4
          %s297 = int_to_ptr.vmem [resolvable:$true] %s296
          %302 = dma.hbm_to_vmem [thread:$0]  %s295, 4096, %s297, [#allocation12], 128, 128, 8
        $region32: #{tpu_custom_call.1} parent=11 // pred_fallthru
          _
        // Predicated region
        $region33: #{tpu_custom_call.1} parent=11 // pred_check
          %p303 = pneg %p203
        $region34: #{tpu_custom_call.1} parent=11 // pred_check_branch
          %305 = sbr.rel (%p303) target = $region36
        $region35: #{tpu_custom_call.1} parent=11 // pred_region
          _
        $region36: #{tpu_custom_call.1} parent=11 // pred_fallthru
          _
      $region12: #{tpu_custom_call.1} parent=5 // pred_fallthru
        _
      %p306 = scmp.lt.s32.totalorder %s25, 2
      // Predicated region
      $region37: #{tpu_custom_call.1} parent=5 // pred_check
        %p307 = pneg %p306
      $region38: #{tpu_custom_call.1} parent=5 // pred_check_branch
        %309 = sbr.rel (%p307) target = $region40
      $region39: #{tpu_custom_call.1} parent=5 // pred_region
        // Predicated region
        $region41: #{tpu_custom_call.1} parent=39 // pred_check
          %p310 = pneg %p45
        $region42: #{tpu_custom_call.1} parent=39 // pred_check_branch
          %312 = sbr.rel (%p310) target = $region44
        $region43: #{tpu_custom_call.1} parent=39 // pred_region
          %s313 = sand.u32 %s35, 1
          %s314 = scalar_lea.sflag [#allocation3], %s313
          %s315 = sand.u32 %s35, 1
          %s316 = smul.addr %s315, 8
          %s317 = scalar_lea.vmem [#allocation2], %s316
          %319 = vsyncadd %s314, 0
          %s320 = smul.addr %s25, 8
          %s321 = scalar_lea.hbm %s0, %s320
          %s323 = sshll.u32 %s321, 4
          %s324 = int_to_ptr.hbm [resolvable:$true] %s323
          %s325 = sshll.u32 %s317, 4
          %s326 = int_to_ptr.vmem [resolvable:$true] %s325
          %328 = dma.hbm_to_vmem [thread:$0]  %s324, 128, %s326, %s314
        $region44: #{tpu_custom_call.1} parent=39 // pred_fallthru
          _
        // Predicated region
        $region45: #{tpu_custom_call.1} parent=39 // pred_check
          %p329 = pneg %p71
        $region46: #{tpu_custom_call.1} parent=39 // pred_check_branch
          %331 = sbr.rel (%p329) target = $region48
        $region47: #{tpu_custom_call.1} parent=39 // pred_region
          %s332 = sand.u32 %s25, 1
          %s333 = scalar_lea.sflag [#allocation6], %s332
          %s334 = sand.u32 %s61, 1
          %s335 = smul.addr %s334, 8
          %s336 = scalar_lea.vmem [#allocation5], %s335
          %338 = vsyncadd %s333, 0
          %s339 = smul.addr %s25, 8
          %s340 = scalar_lea.hbm %s1, %s339
          %s342 = sshll.u32 %s340, 4
          %s343 = int_to_ptr.hbm [resolvable:$true] %s342
          %s344 = sshll.u32 %s336, 4
          %s345 = int_to_ptr.vmem [resolvable:$true] %s344
          %347 = dma.hbm_to_vmem [thread:$0]  %s343, 128, %s345, %s333
        $region48: #{tpu_custom_call.1} parent=39 // pred_fallthru
          _
      $region40: #{tpu_custom_call.1} parent=5 // pred_fallthru
        _
      %p348 = scmp.le.s32.totalorder 1, %s25
      %p349 = scmp.lt.s32.totalorder %s25, 3
      %p350 = pnand %p348, %p349
      %p351 = pneg %p350
      // Predicated region
      $region49: #{tpu_custom_call.1} parent=5 // pred_check
        _
      $region50: #{tpu_custom_call.1} parent=5 // pred_check_branch
        %353 = sbr.rel (%p350) target = $region52
      $region51: #{tpu_custom_call.1} parent=5 // pred_region
        %s354 = ssub.s32 %s25, 1
        %s355 = sand.u32 %s38, 1
        %s356 = scalar_lea.sflag [#allocation3], %s355
        %s357 = sand.u32 %s38, 1
        %s358 = smul.addr %s357, 8
        %s359 = scalar_lea.vmem [#allocation2], %s358
        // Predicated region
        $region53: #{tpu_custom_call.1} parent=51 // pred_check
          %p360 = pneg %p51
        $region54: #{tpu_custom_call.1} parent=51 // pred_check_branch
          %362 = sbr.rel (%p360) target = $region56
        $region55: #{tpu_custom_call.1} parent=51 // pred_region
          %364 = dma.done %s356, 128
        $region56: #{tpu_custom_call.1} parent=51 // pred_fallthru
          _
        %s365 = sand.u32 %s30, 1
        %s366 = scalar_lea.sflag [#allocation6], %s365
        %s367 = sand.u32 %s64, 1
        %s368 = smul.addr %s367, 8
        %s369 = scalar_lea.vmem [#allocation5], %s368
        // Predicated region
        $region57: #{tpu_custom_call.1} parent=51 // pred_check
          %p370 = pneg %p77
        $region58: #{tpu_custom_call.1} parent=51 // pred_check_branch
          %372 = sbr.rel (%p370) target = $region60
        $region59: #{tpu_custom_call.1} parent=51 // pred_region
          %374 = dma.done %s366, 128
        $region60: #{tpu_custom_call.1} parent=51 // pred_fallthru
          _
        // Predicated region
        $region61: #{tpu_custom_call.1} parent=51 // pred_check
          %p375 = pneg %p98
        $region62: #{tpu_custom_call.1} parent=51 // pred_check_branch
          %377 = sbr.rel (%p375) target = $region64
        $region63: #{tpu_custom_call.1} parent=51 // pred_region
          %379 = dma.done [#allocation6], 12288
        $region64: #{tpu_custom_call.1} parent=51 // pred_fallthru
          _
        // Predicated region
        $region65: #{tpu_custom_call.1} parent=51 // pred_check
          %p380 = pneg %p119
        $region66: #{tpu_custom_call.1} parent=51 // pred_check_branch
          %382 = sbr.rel (%p380) target = $region68
        $region67: #{tpu_custom_call.1} parent=51 // pred_region
          %384 = dma.done [#allocation9], 96
        $region68: #{tpu_custom_call.1} parent=51 // pred_fallthru
          _
        // Predicated region
        $region69: #{tpu_custom_call.1} parent=51 // pred_check
          %p385 = pneg %p140
        $region70: #{tpu_custom_call.1} parent=51 // pred_check_branch
          %387 = sbr.rel (%p385) target = $region72
        $region71: #{tpu_custom_call.1} parent=51 // pred_region
          %389 = dma.done [#allocation9], 4096
        $region72: #{tpu_custom_call.1} parent=51 // pred_fallthru
          _
        // Predicated region
        $region73: #{tpu_custom_call.1} parent=51 // pred_check
          %p390 = pneg %p182
        $region74: #{tpu_custom_call.1} parent=51 // pred_check_branch
          %392 = sbr.rel (%p390) target = $region76
        $region75: #{tpu_custom_call.1} parent=51 // pred_region
          %394 = dma.done [#allocation12], 4096
        $region76: #{tpu_custom_call.1} parent=51 // pred_fallthru
          _
        %s395 = sand.u32 %s38, 1
        %s396 = scalar_lea.sflag [#allocation3], %s395
        %s397 = sand.u32 %s38, 1
        %s398 = smul.addr %s397, 8
        %s399 = scalar_lea.vmem [#allocation2], %s398
        %p400 = pneg %p51
        %p401 = pneg %p48
        %s402 = sand.u32 %s30, 1
        %s403 = scalar_lea.sflag [#allocation6], %s402
        %s404 = sand.u32 %s64, 1
        %s405 = smul.addr %s404, 8
        %s406 = scalar_lea.vmem [#allocation5], %s405
        %p407 = pneg %p77
        %p408 = pneg %p74
        %p409 = pneg %p98
        %p410 = pneg %p95
        %p411 = pneg %p119
        %p412 = pneg %p116
        %p413 = pneg %p140
        %p414 = pneg %p137
        %p415 = pneg %p161
        %p416 = pneg %p158
        %p417 = pneg %p182
        %p418 = pneg %p179
        %p419 = pneg %p203
        %p420 = pneg %p200
        %p421 = pneg %p229
        %p422 = pneg %p226
        %s423 = sand.u32 %s216, 1
        %s424 = scalar_lea.sflag [#allocation4], %s423
        %s425 = sand.u32 %s216, 1
        %s426 = smul.addr %s425, 8
        %s427 = scalar_lea.vmem [#allocation13], %s426
        %v428 = vld [vmem:[%s359] sm:$0xff]
        %v429 = vld [vmem:[%s369] sm:$0xff]
        %v430 = vxor.u32 %v429, 2147483648
        %v431 = vmul.f32 %v430, 1.442695
        %v432 = vpow.pop %v431
        %v433 = vadd.f32 %v432, 1.0
        %v434 = vrcp.pop %v433
        %v435 = vmul.f32 %v433, %v434
        %v436 = vsub.f32 1.0, %v435
        %v437 = vmul.f32 %v434, %v436
        %v438 = vadd.f32 %v434, %v437
        %vm439 = vweird.f32 %v433
        %vm440 = vweird.f32 %v434
        %vm441 = vmor %vm439, %vm440
        %v442 = vsel %vm441, %v434, %v438
        %v443 = vand.u32 2147483647, %v433
        %vm444 = vcmp.eq.f32.partialorder %v443, 8.507059e+37
        %v445 = vand.u32 %v433, 2147483648
        %v446 = vor.u32 1.1754944e-38, %v445
        %v447 = vsel %vm444, %v446, %v442
        %v448 = vmul.f32 1.0, %v447
        %v449 = vmul.f32 %v429, %v448
        %v450 = vld [vmem:[#allocation7] sm:$0xff]
        %v451 = vld [vmem:[#allocation7 + $0x8] sm:$0xff]
        %v452 = vld [vmem:[#allocation7 + $0x10] sm:$0xff]
        %v453 = vld [vmem:[#allocation7 + $0x18] sm:$0xff]
        %v454 = vld [vmem:[#allocation7 + $0x20] sm:$0xff]
        %v455 = vld [vmem:[#allocation7 + $0x28] sm:$0xff]
        %v456 = vld [vmem:[#allocation7 + $0x30] sm:$0xff]
        %v457 = vld [vmem:[#allocation7 + $0x38] sm:$0xff]
        %v458 = vld [vmem:[#allocation7 + $0x40] sm:$0xff]
        %v459 = vld [vmem:[#allocation7 + $0x48] sm:$0xff]
        %v460 = vld [vmem:[#allocation7 + $0x50] sm:$0xff]
        %v461 = vld [vmem:[#allocation7 + $0x58] sm:$0xff]
        %v462 = vld [vmem:[#allocation7 + $0x60] sm:$0xff]
        %v463 = vld [vmem:[#allocation7 + $0x68] sm:$0xff]
        %v464 = vld [vmem:[#allocation7 + $0x70] sm:$0xff]
        %v465 = vld [vmem:[#allocation7 + $0x78] sm:$0xff]
        %v466 = vld [vmem:[#allocation7 + $0x80] sm:$0xff]
        %v467 = vld [vmem:[#allocation7 + $0x88] sm:$0xff]
        %v468 = vld [vmem:[#allocation7 + $0x90] sm:$0xff]
        %v469 = vld [vmem:[#allocation7 + $0x98] sm:$0xff]
        %v470 = vld [vmem:[#allocation7 + $0xa0] sm:$0xff]
        %v471 = vld [vmem:[#allocation7 + $0xa8] sm:$0xff]
        %v472 = vld [vmem:[#allocation7 + $0xb0] sm:$0xff]
        %v473 = vld [vmem:[#allocation7 + $0xb8] sm:$0xff]
        %v474 = vld [vmem:[#allocation7 + $0xc0] sm:$0xff]
        %v475 = vld [vmem:[#allocation7 + $0xc8] sm:$0xff]
        %v476 = vld [vmem:[#allocation7 + $0xd0] sm:$0xff]
        %v477 = vld [vmem:[#allocation7 + $0xd8] sm:$0xff]
        %v478 = vld [vmem:[#allocation7 + $0xe0] sm:$0xff]
        %v479 = vld [vmem:[#allocation7 + $0xe8] sm:$0xff]
        %v480 = vld [vmem:[#allocation7 + $0xf0] sm:$0xff]
        %v481 = vld [vmem:[#allocation7 + $0xf8] sm:$0xff]
        %v482 = vld [vmem:[#allocation7 + $0x100] sm:$0xff]
        %v483 = vld [vmem:[#allocation7 + $0x108] sm:$0xff]
        %v484 = vld [vmem:[#allocation7 + $0x110] sm:$0xff]
        %v485 = vld [vmem:[#allocation7 + $0x118] sm:$0xff]
        %v486 = vld [vmem:[#allocation7 + $0x120] sm:$0xff]
        %v487 = vld [vmem:[#allocation7 + $0x128] sm:$0xff]
        %v488 = vld [vmem:[#allocation7 + $0x130] sm:$0xff]
        %v489 = vld [vmem:[#allocation7 + $0x138] sm:$0xff]
        %v490 = vld [vmem:[#allocation7 + $0x140] sm:$0xff]
        %v491 = vld [vmem:[#allocation7 + $0x148] sm:$0xff]
        %v492 = vld [vmem:[#allocation7 + $0x150] sm:$0xff]
        %v493 = vld [vmem:[#allocation7 + $0x158] sm:$0xff]
        %v494 = vld [vmem:[#allocation7 + $0x160] sm:$0xff]
        %v495 = vld [vmem:[#allocation7 + $0x168] sm:$0xff]
        %v496 = vld [vmem:[#allocation7 + $0x170] sm:$0xff]
        %v497 = vld [vmem:[#allocation7 + $0x178] sm:$0xff]
        %v498 = vld [vmem:[#allocation8] sm:$0x7]
        %v500 = vperm.slane %v498, 0
        %v501 = vperm.slane %v498, 1
        %v502 = vperm.slane %v498, 2
        %506 = vmatpush.msra.mxu0 %v495
        %507 = vmatpush.msra.mxu0 %v492
        %508 = vmatpush.msra.mxu0 %v489
        %509 = vmatpush.msra.mxu0 %v486
        %510 = vmatpush.msra.mxu0 %v483
        %511 = vmatpush.msra.mxu0 %v480
        %512 = vmatpush.msra.mxu0 %v477
        %513 = vmatpush.msra.mxu0 %v474
        %514 = vmatpush.msra.mxu0 %v471
        %515 = vmatpush.msra.mxu0 %v468
        %516 = vmatpush.msra.mxu0 %v465
        %517 = vmatpush.msra.mxu0 %v462
        %518 = vmatpush.msra.mxu0 %v459
        %519 = vmatpush.msra.mxu0 %v456
        %520 = vmatpush.msra.mxu0 %v453
        %521 = vmatpush.msra.mxu0 %v450
        %522 = vmatmul.f32.gmra.mxu0 %v449
        %v523 = vpop.f32.mrf.mxu0
        %v524 = vadd.f32 %v500, %v523
        %525 = vdwg.mxu0
        %526 = vmatpush.msra.mxu0 %v496
        %527 = vmatpush.msra.mxu0 %v493
        %528 = vmatpush.msra.mxu0 %v490
        %529 = vmatpush.msra.mxu0 %v487
        %530 = vmatpush.msra.mxu0 %v484
        %531 = vmatpush.msra.mxu0 %v481
        %532 = vmatpush.msra.mxu0 %v478
        %533 = vmatpush.msra.mxu0 %v475
        %534 = vmatpush.msra.mxu0 %v472
        %535 = vmatpush.msra.mxu0 %v469
        %536 = vmatpush.msra.mxu0 %v466
        %537 = vmatpush.msra.mxu0 %v463
        %538 = vmatpush.msra.mxu0 %v460
        %539 = vmatpush.msra.mxu0 %v457
        %540 = vmatpush.msra.mxu0 %v454
        %541 = vmatpush.msra.mxu0 %v451
        %542 = vmatmul.f32.gmra.mxu0 %v449
        %v543 = vpop.f32.mrf.mxu0
        %v544 = vadd.f32 %v501, %v543
        %545 = vdwg.mxu0
        %546 = vmatpush.msra.mxu0 %v497
        %547 = vmatpush.msra.mxu0 %v494
        %548 = vmatpush.msra.mxu0 %v491
        %549 = vmatpush.msra.mxu0 %v488
        %550 = vmatpush.msra.mxu0 %v485
        %551 = vmatpush.msra.mxu0 %v482
        %552 = vmatpush.msra.mxu0 %v479
        %553 = vmatpush.msra.mxu0 %v476
        %554 = vmatpush.msra.mxu0 %v473
        %555 = vmatpush.msra.mxu0 %v470
        %556 = vmatpush.msra.mxu0 %v467
        %557 = vmatpush.msra.mxu0 %v464
        %558 = vmatpush.msra.mxu0 %v461
        %559 = vmatpush.msra.mxu0 %v458
        %560 = vmatpush.msra.mxu0 %v455
        %561 = vmatpush.msra.mxu0 %v452
        %562 = vmatmul.f32.gmra.mxu0 %v449
        %v563 = vpop.f32.mrf.mxu0
        %v564 = vadd.f32 %v502, %v563
        %565 = vdwg.mxu0
        %566 = vadd.xlane.f32.xlu0 %v428
        %v567 = vpop.xlane.xlu0 %566
        %v568 = vmul.f32 %v428, %v428
        %569 = vadd.xlane.f32.xlu0 %v568
        %v570 = vpop.xlane.xlu0 %569
        %v571 = vmul.f32 %v567, 0.03125
        %v572 = vmul.f32 %v570, 0.03125
        %v573 = vmul.f32 %v571, %v571
        %v574 = vsub.f32 %v572, %v573
        %v575 = vmax.f32 %v574, 0.0
        %v576 = vsub.f32 %v428, %v571
        %v577 = vadd.f32 %v575, 1e-06
        %v578 = vrsqrt.pop %v577
        %v579 = vmul.f32 %v578, %v577
        %v580 = vmul.f32 %v579, %v578
        %v581 = vmul.f32 0.5, %v580
        %v582 = vsub.f32 1.5, %v581
        %v583 = vmul.f32 %v578, %v582
        %vm584 = vweird.f32 %v577
        %vm585 = vweird.f32 %v578
        %vm586 = vmor %vm584, %vm585
        %v587 = vsel %vm586, %v578, %v583
        %v588 = vmul.f32 %v576, %v587
        %v589 = vadd.f32 %v544, 1.0
        %v590 = vmul.f32 %v588, %v589
        %v591 = vadd.f32 %v590, %v524
        %v592 = vld [vmem:[#allocation10] sm:$0xff]
        %v593 = vld [vmem:[#allocation10 + $0x8] sm:$0xff]
        %v594 = vld [vmem:[#allocation10 + $0x10] sm:$0xff]
        %v595 = vld [vmem:[#allocation10 + $0x18] sm:$0xff]
        %v596 = vld [vmem:[#allocation10 + $0x20] sm:$0xff]
        %v597 = vld [vmem:[#allocation10 + $0x28] sm:$0xff]
        %v598 = vld [vmem:[#allocation10 + $0x30] sm:$0xff]
        %v599 = vld [vmem:[#allocation10 + $0x38] sm:$0xff]
        %v600 = vld [vmem:[#allocation10 + $0x40] sm:$0xff]
        %v601 = vld [vmem:[#allocation10 + $0x48] sm:$0xff]
        %v602 = vld [vmem:[#allocation10 + $0x50] sm:$0xff]
        %v603 = vld [vmem:[#allocation10 + $0x58] sm:$0xff]
        %v604 = vld [vmem:[#allocation10 + $0x60] sm:$0xff]
        %v605 = vld [vmem:[#allocation10 + $0x68] sm:$0xff]
        %v606 = vld [vmem:[#allocation10 + $0x70] sm:$0xff]
        %v607 = vld [vmem:[#allocation10 + $0x78] sm:$0xff]
        %v608 = vld [vmem:[%s5] sm:$0x1]
        %v610 = vperm.slane %v608, 0
        %612 = vmatpush.msra.mxu0 %v607
        %613 = vmatpush.msra.mxu0 %v606
        %614 = vmatpush.msra.mxu0 %v605
        %615 = vmatpush.msra.mxu0 %v604
        %616 = vmatpush.msra.mxu0 %v603
        %617 = vmatpush.msra.mxu0 %v602
        %618 = vmatpush.msra.mxu0 %v601
        %619 = vmatpush.msra.mxu0 %v600
        %620 = vmatpush.msra.mxu0 %v599
        %621 = vmatpush.msra.mxu0 %v598
        %622 = vmatpush.msra.mxu0 %v597
        %623 = vmatpush.msra.mxu0 %v596
        %624 = vmatpush.msra.mxu0 %v595
        %625 = vmatpush.msra.mxu0 %v594
        %626 = vmatpush.msra.mxu0 %v593
        %627 = vmatpush.msra.mxu0 %v592
        %628 = vmatmul.f32.gmra.mxu0 %v591
        %v629 = vpop.f32.mrf.mxu0
        %v630 = vadd.f32 %v610, %v629
        %631 = vdwg.mxu0
        %v632 = vmax.f32 %v630, 0.0
        %v633 = vld [vmem:[#allocation11] sm:$0xff]
        %v634 = vld [vmem:[#allocation11 + $0x8] sm:$0xff]
        %v635 = vld [vmem:[#allocation11 + $0x10] sm:$0xff]
        %v636 = vld [vmem:[#allocation11 + $0x18] sm:$0xff]
        %v637 = vld [vmem:[#allocation11 + $0x20] sm:$0xff]
        %v638 = vld [vmem:[#allocation11 + $0x28] sm:$0xff]
        %v639 = vld [vmem:[#allocation11 + $0x30] sm:$0xff]
        %v640 = vld [vmem:[#allocation11 + $0x38] sm:$0xff]
        %v641 = vld [vmem:[#allocation11 + $0x40] sm:$0xff]
        %v642 = vld [vmem:[#allocation11 + $0x48] sm:$0xff]
        %v643 = vld [vmem:[#allocation11 + $0x50] sm:$0xff]
        %v644 = vld [vmem:[#allocation11 + $0x58] sm:$0xff]
        %v645 = vld [vmem:[#allocation11 + $0x60] sm:$0xff]
        %v646 = vld [vmem:[#allocation11 + $0x68] sm:$0xff]
        %v647 = vld [vmem:[#allocation11 + $0x70] sm:$0xff]
        %v648 = vld [vmem:[#allocation11 + $0x78] sm:$0xff]
        %v649 = vld [vmem:[%s7] sm:$0x1]
        %v651 = vperm.slane %v649, 0
        %653 = vmatpush.msra.mxu0 %v648
        %654 = vmatpush.msra.mxu0 %v647
        %655 = vmatpush.msra.mxu0 %v646
        %656 = vmatpush.msra.mxu0 %v645
        %657 = vmatpush.msra.mxu0 %v644
        %658 = vmatpush.msra.mxu0 %v643
        %659 = vmatpush.msra.mxu0 %v642
        %660 = vmatpush.msra.mxu0 %v641
        %661 = vmatpush.msra.mxu0 %v640
        %662 = vmatpush.msra.mxu0 %v639
        %663 = vmatpush.msra.mxu0 %v638
        %664 = vmatpush.msra.mxu0 %v637
        %665 = vmatpush.msra.mxu0 %v636
        %666 = vmatpush.msra.mxu0 %v635
        %667 = vmatpush.msra.mxu0 %v634
        %668 = vmatpush.msra.mxu0 %v633
        %669 = vmatmul.f32.gmra.mxu0 %v632
        %v670 = vpop.f32.mrf.mxu0
        %v671 = vadd.f32 %v651, %v670
        %672 = vdwg.mxu0
        %v673 = vmul.f32 %v564, %v671
        %v674 = vadd.f32 %v428, %v673
        %s675 = scalar_lea.vmem [#allocation7], 384
        %v676 = vld [vmem:[%s675] sm:$0xff]
        %v677 = vld [vmem:[%s675 + $0x8] sm:$0xff]
        %v678 = vld [vmem:[%s675 + $0x10] sm:$0xff]
        %v679 = vld [vmem:[%s675 + $0x18] sm:$0xff]
        %v680 = vld [vmem:[%s675 + $0x20] sm:$0xff]
        %v681 = vld [vmem:[%s675 + $0x28] sm:$0xff]
        %v682 = vld [vmem:[%s675 + $0x30] sm:$0xff]
        %v683 = vld [vmem:[%s675 + $0x38] sm:$0xff]
        %v684 = vld [vmem:[%s675 + $0x40] sm:$0xff]
        %v685 = vld [vmem:[%s675 + $0x48] sm:$0xff]
        %v686 = vld [vmem:[%s675 + $0x50] sm:$0xff]
        %v687 = vld [vmem:[%s675 + $0x58] sm:$0xff]
        %v688 = vld [vmem:[%s675 + $0x60] sm:$0xff]
        %v689 = vld [vmem:[%s675 + $0x68] sm:$0xff]
        %v690 = vld [vmem:[%s675 + $0x70] sm:$0xff]
        %v691 = vld [vmem:[%s675 + $0x78] sm:$0xff]
        %v692 = vld [vmem:[%s675 + $0x80] sm:$0xff]
        %v693 = vld [vmem:[%s675 + $0x88] sm:$0xff]
        %v694 = vld [vmem:[%s675 + $0x90] sm:$0xff]
        %v695 = vld [vmem:[%s675 + $0x98] sm:$0xff]
        %v696 = vld [vmem:[%s675 + $0xa0] sm:$0xff]
        %v697 = vld [vmem:[%s675 + $0xa8] sm:$0xff]
        %v698 = vld [vmem:[%s675 + $0xb0] sm:$0xff]
        %v699 = vld [vmem:[%s675 + $0xb8] sm:$0xff]
        %v700 = vld [vmem:[%s675 + $0xc0] sm:$0xff]
        %v701 = vld [vmem:[%s675 + $0xc8] sm:$0xff]
        %v702 = vld [vmem:[%s675 + $0xd0] sm:$0xff]
        %v703 = vld [vmem:[%s675 + $0xd8] sm:$0xff]
        %v704 = vld [vmem:[%s675 + $0xe0] sm:$0xff]
        %v705 = vld [vmem:[%s675 + $0xe8] sm:$0xff]
        %v706 = vld [vmem:[%s675 + $0xf0] sm:$0xff]
        %v707 = vld [vmem:[%s675 + $0xf8] sm:$0xff]
        %v708 = vld [vmem:[%s675 + $0x100] sm:$0xff]
        %v709 = vld [vmem:[%s675 + $0x108] sm:$0xff]
        %v710 = vld [vmem:[%s675 + $0x110] sm:$0xff]
        %v711 = vld [vmem:[%s675 + $0x118] sm:$0xff]
        %v712 = vld [vmem:[%s675 + $0x120] sm:$0xff]
        %v713 = vld [vmem:[%s675 + $0x128] sm:$0xff]
        %v714 = vld [vmem:[%s675 + $0x130] sm:$0xff]
        %v715 = vld [vmem:[%s675 + $0x138] sm:$0xff]
        %v716 = vld [vmem:[%s675 + $0x140] sm:$0xff]
        %v717 = vld [vmem:[%s675 + $0x148] sm:$0xff]
        %v718 = vld [vmem:[%s675 + $0x150] sm:$0xff]
        %v719 = vld [vmem:[%s675 + $0x158] sm:$0xff]
        %v720 = vld [vmem:[%s675 + $0x160] sm:$0xff]
        %v721 = vld [vmem:[%s675 + $0x168] sm:$0xff]
        %v722 = vld [vmem:[%s675 + $0x170] sm:$0xff]
        %v723 = vld [vmem:[%s675 + $0x178] sm:$0xff]
        %s724 = scalar_lea.vmem [#allocation8], 3
        %v725 = vld [vmem:[%s724] sm:$0x7]
        %v727 = vperm.slane %v725, 0
        %v728 = vperm.slane %v725, 1
        %v729 = vperm.slane %v725, 2
        %733 = vmatpush.msra.mxu0 %v721
        %734 = vmatpush.msra.mxu0 %v718
        %735 = vmatpush.msra.mxu0 %v715
        %736 = vmatpush.msra.mxu0 %v712
        %737 = vmatpush.msra.mxu0 %v709
        %738 = vmatpush.msra.mxu0 %v706
        %739 = vmatpush.msra.mxu0 %v703
        %740 = vmatpush.msra.mxu0 %v700
        %741 = vmatpush.msra.mxu0 %v697
        %742 = vmatpush.msra.mxu0 %v694
        %743 = vmatpush.msra.mxu0 %v691
        %744 = vmatpush.msra.mxu0 %v688
        %745 = vmatpush.msra.mxu0 %v685
        %746 = vmatpush.msra.mxu0 %v682
        %747 = vmatpush.msra.mxu0 %v679
        %748 = vmatpush.msra.mxu0 %v676
        %749 = vmatmul.f32.gmra.mxu0 %v449
        %v750 = vpop.f32.mrf.mxu0
        %v751 = vadd.f32 %v727, %v750
        %752 = vdwg.mxu0
        %753 = vmatpush.msra.mxu0 %v722
        %754 = vmatpush.msra.mxu0 %v719
        %755 = vmatpush.msra.mxu0 %v716
        %756 = vmatpush.msra.mxu0 %v713
        %757 = vmatpush.msra.mxu0 %v710
        %758 = vmatpush.msra.mxu0 %v707
        %759 = vmatpush.msra.mxu0 %v704
        %760 = vmatpush.msra.mxu0 %v701
        %761 = vmatpush.msra.mxu0 %v698
        %762 = vmatpush.msra.mxu0 %v695
        %763 = vmatpush.msra.mxu0 %v692
        %764 = vmatpush.msra.mxu0 %v689
        %765 = vmatpush.msra.mxu0 %v686
        %766 = vmatpush.msra.mxu0 %v683
        %767 = vmatpush.msra.mxu0 %v680
        %768 = vmatpush.msra.mxu0 %v677
        %769 = vmatmul.f32.gmra.mxu0 %v449
        %v770 = vpop.f32.mrf.mxu0
        %v771 = vadd.f32 %v728, %v770
        %772 = vdwg.mxu0
        %773 = vmatpush.msra.mxu0 %v723
        %774 = vmatpush.msra.mxu0 %v720
        %775 = vmatpush.msra.mxu0 %v717
        %776 = vmatpush.msra.mxu0 %v714
        %777 = vmatpush.msra.mxu0 %v711
        %778 = vmatpush.msra.mxu0 %v708
        %779 = vmatpush.msra.mxu0 %v705
        %780 = vmatpush.msra.mxu0 %v702
        %781 = vmatpush.msra.mxu0 %v699
        %782 = vmatpush.msra.mxu0 %v696
        %783 = vmatpush.msra.mxu0 %v693
        %784 = vmatpush.msra.mxu0 %v690
        %785 = vmatpush.msra.mxu0 %v687
        %786 = vmatpush.msra.mxu0 %v684
        %787 = vmatpush.msra.mxu0 %v681
        %788 = vmatpush.msra.mxu0 %v678
        %789 = vmatmul.f32.gmra.mxu0 %v449
        %v790 = vpop.f32.mrf.mxu0
        %v791 = vadd.f32 %v729, %v790
        %792 = vdwg.mxu0
        %793 = vadd.xlane.f32.xlu0 %v674
        %v794 = vpop.xlane.xlu0 %793
        %v795 = vmul.f32 %v674, %v674
        %796 = vadd.xlane.f32.xlu0 %v795
        %v797 = vpop.xlane.xlu0 %796
        %v798 = vmul.f32 %v794, 0.03125
        %v799 = vmul.f32 %v797, 0.03125
        %v800 = vmul.f32 %v798, %v798
        %v801 = vsub.f32 %v799, %v800
        %v802 = vmax.f32 %v801, 0.0
        %v803 = vsub.f32 %v674, %v798
        %v804 = vadd.f32 %v802, 1e-06
        %v805 = vrsqrt.pop %v804
        %v806 = vmul.f32 %v805, %v804
        %v807 = vmul.f32 %v806, %v805
        %v808 = vmul.f32 0.5, %v807
        %v809 = vsub.f32 1.5, %v808
        %v810 = vmul.f32 %v805, %v809
        %vm811 = vweird.f32 %v804
        %vm812 = vweird.f32 %v805
        %vm813 = vmor %vm811, %vm812
        %v814 = vsel %vm813, %v805, %v810
        %v815 = vmul.f32 %v803, %v814
        %v816 = vadd.f32 %v771, 1.0
        %v817 = vmul.f32 %v815, %v816
        %v818 = vadd.f32 %v817, %v751
        %s819 = scalar_lea.vmem [#allocation10], 128
        %v820 = vld [vmem:[%s819] sm:$0xff]
        %v821 = vld [vmem:[%s819 + $0x8] sm:$0xff]
        %v822 = vld [vmem:[%s819 + $0x10] sm:$0xff]
        %v823 = vld [vmem:[%s819 + $0x18] sm:$0xff]
        %v824 = vld [vmem:[%s819 + $0x20] sm:$0xff]
        %v825 = vld [vmem:[%s819 + $0x28] sm:$0xff]
        %v826 = vld [vmem:[%s819 + $0x30] sm:$0xff]
        %v827 = vld [vmem:[%s819 + $0x38] sm:$0xff]
        %v828 = vld [vmem:[%s819 + $0x40] sm:$0xff]
        %v829 = vld [vmem:[%s819 + $0x48] sm:$0xff]
        %v830 = vld [vmem:[%s819 + $0x50] sm:$0xff]
        %v831 = vld [vmem:[%s819 + $0x58] sm:$0xff]
        %v832 = vld [vmem:[%s819 + $0x60] sm:$0xff]
        %v833 = vld [vmem:[%s819 + $0x68] sm:$0xff]
        %v834 = vld [vmem:[%s819 + $0x70] sm:$0xff]
        %v835 = vld [vmem:[%s819 + $0x78] sm:$0xff]
        %s836 = scalar_lea.vmem %s5, 1
        %v837 = vld [vmem:[%s836] sm:$0x1]
        %v839 = vperm.slane %v837, 0
        %841 = vmatpush.msra.mxu0 %v835
        %842 = vmatpush.msra.mxu0 %v834
        %843 = vmatpush.msra.mxu0 %v833
        %844 = vmatpush.msra.mxu0 %v832
        %845 = vmatpush.msra.mxu0 %v831
        %846 = vmatpush.msra.mxu0 %v830
        %847 = vmatpush.msra.mxu0 %v829
        %848 = vmatpush.msra.mxu0 %v828
        %849 = vmatpush.msra.mxu0 %v827
        %850 = vmatpush.msra.mxu0 %v826
        %851 = vmatpush.msra.mxu0 %v825
        %852 = vmatpush.msra.mxu0 %v824
        %853 = vmatpush.msra.mxu0 %v823
        %854 = vmatpush.msra.mxu0 %v822
        %855 = vmatpush.msra.mxu0 %v821
        %856 = vmatpush.msra.mxu0 %v820
        %857 = vmatmul.f32.gmra.mxu0 %v818
        %v858 = vpop.f32.mrf.mxu0
        %v859 = vadd.f32 %v839, %v858
        %860 = vdwg.mxu0
        %v861 = vmax.f32 %v859, 0.0
        %s862 = scalar_lea.vmem [#allocation11], 128
        %v863 = vld [vmem:[%s862] sm:$0xff]
        %v864 = vld [vmem:[%s862 + $0x8] sm:$0xff]
        %v865 = vld [vmem:[%s862 + $0x10] sm:$0xff]
        %v866 = vld [vmem:[%s862 + $0x18] sm:$0xff]
        %v867 = vld [vmem:[%s862 + $0x20] sm:$0xff]
        %v868 = vld [vmem:[%s862 + $0x28] sm:$0xff]
        %v869 = vld [vmem:[%s862 + $0x30] sm:$0xff]
        %v870 = vld [vmem:[%s862 + $0x38] sm:$0xff]
        %v871 = vld [vmem:[%s862 + $0x40] sm:$0xff]
        %v872 = vld [vmem:[%s862 + $0x48] sm:$0xff]
        %v873 = vld [vmem:[%s862 + $0x50] sm:$0xff]
        %v874 = vld [vmem:[%s862 + $0x58] sm:$0xff]
        %v875 = vld [vmem:[%s862 + $0x60] sm:$0xff]
        %v876 = vld [vmem:[%s862 + $0x68] sm:$0xff]
        %v877 = vld [vmem:[%s862 + $0x70] sm:$0xff]
        %v878 = vld [vmem:[%s862 + $0x78] sm:$0xff]
        %s879 = scalar_lea.vmem %s7, 1
        %v880 = vld [vmem:[%s879] sm:$0x1]
        %v882 = vperm.slane %v880, 0
        %884 = vmatpush.msra.mxu0 %v878
        %885 = vmatpush.msra.mxu0 %v877
        %886 = vmatpush.msra.mxu0 %v876
        %887 = vmatpush.msra.mxu0 %v875
        %888 = vmatpush.msra.mxu0 %v874
        %889 = vmatpush.msra.mxu0 %v873
        %890 = vmatpush.msra.mxu0 %v872
        %891 = vmatpush.msra.mxu0 %v871
        %892 = vmatpush.msra.mxu0 %v870
        %893 = vmatpush.msra.mxu0 %v869
        %894 = vmatpush.msra.mxu0 %v868
        %895 = vmatpush.msra.mxu0 %v867
        %896 = vmatpush.msra.mxu0 %v866
        %897 = vmatpush.msra.mxu0 %v865
        %898 = vmatpush.msra.mxu0 %v864
        %899 = vmatpush.msra.mxu0 %v863
        %900 = vmatmul.f32.gmra.mxu0 %v861
        %v901 = vpop.f32.mrf.mxu0
        %v902 = vadd.f32 %v882, %v901
        %903 = vdwg.mxu0
        %v904 = vmul.f32 %v791, %v902
        %v905 = vadd.f32 %v674, %v904
        %906 = vst [vmem:[%s427] sm:$0xff] %v905
        %s907 = sand.u32 %s216, 1
        %s908 = scalar_lea.sflag [#allocation4], %s907
        %s909 = sand.u32 %s216, 1
        %s910 = smul.addr %s909, 8
        %s911 = scalar_lea.vmem [#allocation13], %s910
        // Predicated region
        $region77: #{tpu_custom_call.1} parent=51 // pred_check
          %p912 = pneg %p226
        $region78: #{tpu_custom_call.1} parent=51 // pred_check_branch
          %914 = sbr.rel (%p912) target = $region80
        $region79: #{tpu_custom_call.1} parent=51 // pred_region
          %916 = vsyncadd %s908, 0
          %s917 = smul.addr %s30, 8
          %s918 = scalar_lea.hbm %s8, %s917
          %s920 = sshll.u32 %s911, 4
          %s921 = int_to_ptr.vmem [resolvable:$true] %s920
          %s922 = sshll.u32 %s918, 4
          %s923 = int_to_ptr.hbm [resolvable:$true] %s922
          %925 = dma.vmem_to_hbm [thread:$0]  %s921, 128, %s923, %s908
        $region80: #{tpu_custom_call.1} parent=51 // pred_fallthru
          _
      $region52: #{tpu_custom_call.1} parent=5 // pred_fallthru
        _
      %p926 = scmp.le.s32.totalorder 2, %s25
      // Predicated region
      $region81: #{tpu_custom_call.1} parent=5 // pred_check
        %p927 = pneg %p926
      $region82: #{tpu_custom_call.1} parent=5 // pred_check_branch
        %929 = sbr.rel (%p927) target = $region84
      $region83: #{tpu_custom_call.1} parent=5 // pred_region
        %s930 = ssub.s32 %s25, 2
        // Predicated region
        $region85: #{tpu_custom_call.1} parent=83 // pred_check
          %p931 = pneg %p232
        $region86: #{tpu_custom_call.1} parent=83 // pred_check_branch
          %933 = sbr.rel (%p931) target = $region88
        $region87: #{tpu_custom_call.1} parent=83 // pred_region
          %s934 = sand.u32 %s217, 1
          %s935 = scalar_lea.sflag [#allocation4], %s934
          %s936 = sand.u32 %s217, 1
          %s937 = smul.addr %s936, 8
          %s938 = scalar_lea.vmem [#allocation13], %s937
          %940 = dma.done %s935, 128
        $region88: #{tpu_custom_call.1} parent=83 // pred_fallthru
          _
      $region84: #{tpu_custom_call.1} parent=5 // pred_fallthru
        _
    $region6: #{tpu_custom_call.1} parent=1 // loop_footer
      %s29 = sadd.s32 1, %s25
    $region7: #{tpu_custom_call.1} parent=1 // loop_footer_branch
      %24 = sbr.rel target = $region3
    $region8: #{tpu_custom_call.1} parent=1 // loop_exit
      _
    %941 = vsyncpa [#allocation3], 1
    %s942 = scalar_lea.sflag [#allocation3], 1
    %943 = vsyncpa %s942, 1
    %944 = vsyncpa [#allocation6], 1
    %s945 = scalar_lea.sflag [#allocation6], 1
    %946 = vsyncpa %s945, 1
    %947 = vsyncpa [#allocation9], 1
    %948 = vsyncpa [#allocation12], 1
    %949 = vsyncpa [#allocation4], 1
    %s950 = scalar_lea.sflag [#allocation4], 1
    %951 = vsyncpa %s950, 1

// kernel: tpu_custom_call.1
$region0: #{tpu_custom_call.1}
  #allocation0 [shape = 'u32[]', space=smem, size = 0x4, offset = 0x4, fixed_abs, tag = 'smem constant byte address 0x4 - core index']
  #allocation1 [shape = 'u32[72,128]{1,0:T(1,128)}', space=vmem, size = 0x9000, scoped, tag = 'internal scratch']
  %s0 = inlined_call_operand.hbm [shape: f32[16,128], index: 0, kind: input, shape index: {}]
  %s1 = inlined_call_operand.hbm [shape: f32[16,128], index: 1, kind: input, shape index: {}]
  %s2 = inlined_call_operand.hbm [shape: f32[2,128,384], index: 2, kind: input, shape index: {}]
  %s3 = inlined_call_operand.hbm [shape: f32[2,1,384], index: 3, kind: input, shape index: {}]
  %s4 = inlined_call_operand.hbm [shape: f32[2,128,128], index: 4, kind: input, shape index: {}]
  %s5 = inlined_call_operand.vmem [shape: f32[2,1,128], index: 5, kind: input, shape index: {}]
  %s6 = inlined_call_operand.hbm [shape: f32[2,128,128], index: 6, kind: input, shape index: {}]
  %s7 = inlined_call_operand.vmem [shape: f32[2,1,128], index: 7, kind: input, shape index: {}]
  %s8 = inlined_call_operand.hbm [shape: f32[16,128], index: 8, kind: output, shape index: {}]
  %s9 = sld [smem:[#allocation0]]
  $region89: #{tpu_custom_call.1} parent=0
    _
  %s11 = ssub.s32 1, %s9
  %s12 = scalar_select 0, %s11, %s9
  $region1: #{tpu_custom_call.1} parent=0
    #allocation2 [shape = 'u8[8192]{0}', space=vmem, size = 0x2000, scoped, tag = 'input window, operand 0']
    #allocation3 [shape = 's32[2]{0}', space=sflag, size = 0x8, scoped, tag = 'scoped memory for tpu_custom_call.1']
    #allocation4 [shape = 's32[2]{0}', space=sflag, size = 0x8, scoped, tag = 'scoped memory for tpu_custom_call.1']
    #allocation5 [shape = 'u8[8192]{0}', space=vmem, size = 0x2000, scoped, tag = 'input window, operand 1']
    #allocation6 [shape = 's32[2]{0}', space=sflag, size = 0x8, scoped, tag = 'scoped memory for tpu_custom_call.1']
    #allocation7 [shape = 'u8[393216]{0}', space=vmem, size = 0x60000, scoped, tag = 'input window, operand 2, single buffered']
    #allocation8 [shape = 'u8[3072]{0}', space=vmem, size = 0xc00, scoped, tag = 'input window, operand 3, single buffered']
    #allocation9 [shape = 's32[1]{0}', space=sflag, size = 0x4, scoped, tag = 'scoped memory for tpu_custom_call.1']
    #allocation10 [shape = 'u8[131072]{0}', space=vmem, size = 0x20000, scoped, tag = 'input window, operand 4, single buffered']
    #allocation11 [shape = 'u8[131072]{0}', space=vmem, size = 0x20000, scoped, tag = 'input window, operand 6, single buffered']
    #allocation12 [shape = 's32[1]{0}', space=sflag, size = 0x4, scoped, tag = 'scoped memory for tpu_custom_call.1']
    #allocation13 [shape = 'u8[8192]{0}', space=vmem, size = 0x2000, scoped, tag = 'output window, operand 0']
    %13 = vsyncpa [#allocation3], 0
    %s14 = scalar_lea.sflag [#allocation3], 1
    %15 = vsyncpa %s14, 0
    %16 = vsyncpa [#allocation6], 0
    %s17 = scalar_lea.sflag [#allocation6], 1
    %18 = vsyncpa %s17, 0
    %19 = vsyncpa [#allocation9], 0
    %20 = vsyncpa [#allocation12], 0
    %21 = vsyncpa [#allocation4], 0
    %s22 = scalar_lea.sflag [#allocation4], 1
    %23 = vsyncpa %s22, 0
    loop: start=0, step=1, limit=4
    $region2: #{tpu_custom_call.1} parent=1 // loop_pre_header
      _
    $region3: #{tpu_custom_call.1} parent=1 // loop_header
      %s25 = sphi 0, %s29
      %p26 = scmp.ge.s32.totalorder %s25, 4
      %s35 = sphi 0, %s37
      %s38 = sphi 0, %s35
      %s39 = sphi 0, %s38
      %s55 = sphi 0, %s39
      %s61 = sphi 0, %s63
      %s64 = sphi 0, %s61
      %s65 = sphi 0, %s64
      %s81 = sphi 0, %s65
      %s85 = sphi 0, %s85
      %s87 = sphi 0, %s85
      %s88 = sphi 0, %s87
      %s102 = sphi 0, %s88
      %s106 = sphi 0, %s106
      %s108 = sphi 0, %s106
      %s109 = sphi 0, %s108
      %s123 = sphi 0, %s109
      %s127 = sphi 0, %s127
      %s129 = sphi 0, %s127
      %s130 = sphi 0, %s129
      %s144 = sphi 0, %s130
      %s148 = sphi 0, %s148
      %s150 = sphi 0, %s148
      %s151 = sphi 0, %s150
      %s165 = sphi 0, %s151
      %s169 = sphi 0, %s169
      %s171 = sphi 0, %s169
      %s172 = sphi 0, %s171
      %s186 = sphi 0, %s172
      %s190 = sphi 0, %s190
      %s192 = sphi 0, %s190
      %s193 = sphi 0, %s192
      %s207 = sphi 0, %s193
      %s213 = sphi 0, %s215
      %s216 = sphi 0, %s213
      %s217 = sphi 0, %s216
      %s233 = sphi 0, %s217
    $region4: #{tpu_custom_call.1} parent=1 // loop_header_branch
      %28 = sbr.rel (%p26) target = $region8
    $region5: #{tpu_custom_call.1} parent=1 // loop_body
      %s30 = ssub.s32 %s25, 1
      %s31 = ssub.s32 %s25, 2
      %s32 = sadd.s32 %s25, 1
      %s33 = ssub.s32 %s25, %s32
      %p34 = scmp.eq.s32.totalorder %s33, 0
      %s36 = sadd.s32 %s35, 1
      %s37 = scalar_select %p34, %s35, %s36
      %p40 = pneg %p34
      %p41 = scmp.eq.s32.totalorder %s25, 1
      %p42 = por %p40, %p41
      %p43 = scmp.ne.s32.totalorder %s35, %s38
      %p44 = scmp.eq.s32.totalorder %s25, 0
      %p45 = por %p43, %p44
      %p46 = scmp.ne.s32.totalorder %s35, %s38
      %p47 = scmp.eq.s32.totalorder %s30, 1
      %p48 = por %p46, %p47
      %p49 = scmp.ne.s32.totalorder %s38, %s39
      %p50 = scmp.eq.s32.totalorder %s30, 0
      %p51 = por %p49, %p50
      %p52 = scmp.ne.s32.totalorder %s38, %s39
      %p53 = scmp.eq.s32.totalorder %s31, 1
      %p54 = por %p52, %p53
      %p56 = scmp.ne.s32.totalorder %s39, %s55
      %p57 = scmp.eq.s32.totalorder %s31, 0
      %p58 = por %p56, %p57
      %s59 = ssub.s32 %s25, %s32
      %p60 = scmp.eq.s32.totalorder %s59, 0
      %s62 = sadd.s32 %s61, 1
      %s63 = scalar_select %p60, %s61, %s62
      %p66 = pneg %p60
      %p67 = scmp.eq.s32.totalorder %s25, 1
      %p68 = por %p66, %p67
      %p69 = scmp.ne.s32.totalorder %s61, %s64
      %p70 = scmp.eq.s32.totalorder %s25, 0
      %p71 = por %p69, %p70
      %p72 = scmp.ne.s32.totalorder %s61, %s64
      %p73 = scmp.eq.s32.totalorder %s30, 1
      %p74 = por %p72, %p73
      %p75 = scmp.ne.s32.totalorder %s64, %s65
      %p76 = scmp.eq.s32.totalorder %s30, 0
      %p77 = por %p75, %p76
      %p78 = scmp.ne.s32.totalorder %s64, %s65
      %p79 = scmp.eq.s32.totalorder %s31, 1
      %p80 = por %p78, %p79
      %p82 = scmp.ne.s32.totalorder %s65, %s81
      %p83 = scmp.eq.s32.totalorder %s31, 0
      %p84 = por %p82, %p83
      %s86 = sadd.s32 %s85, 1
      %p89 = scmp.eq.s32.totalorder %s25, 1
      %p90 = scmp.ne.s32.totalorder %s85, %s87
      %p91 = scmp.eq.s32.totalorder %s25, 0
      %p92 = por %p90, %p91
      %p93 = scmp.ne.s32.totalorder %s85, %s87
      %p94 = scmp.eq.s32.totalorder %s30, 1
      %p95 = por %p93, %p94
      %p96 = scmp.ne.s32.totalorder %s87, %s88
      %p97 = scmp.eq.s32.totalorder %s30, 0
      %p98 = por %p96, %p97
      %p99 = scmp.ne.s32.totalorder %s87, %s88
      %p100 = scmp.eq.s32.totalorder %s31, 1
      %p101 = por %p99, %p100
      %p103 = scmp.ne.s32.totalorder %s88, %s102
      %p104 = scmp.eq.s32.totalorder %s31, 0
      %p105 = por %p103, %p104
      %s107 = sadd.s32 %s106, 1
      %p110 = scmp.eq.s32.totalorder %s25, 1
      %p111 = scmp.ne.s32.totalorder %s106, %s108
      %p112 = scmp.eq.s32.totalorder %s25, 0
      %p113 = por %p111, %p112
      %p114 = scmp.ne.s32.totalorder %s106, %s108
      %p115 = scmp.eq.s32.totalorder %s30, 1
      %p116 = por %p114, %p115
      %p117 = scmp.ne.s32.totalorder %s108, %s109
      %p118 = scmp.eq.s32.totalorder %s30, 0
      %p119 = por %p117, %p118
      %p120 = scmp.ne.s32.totalorder %s108, %s109
      %p121 = scmp.eq.s32.totalorder %s31, 1
      %p122 = por %p120, %p121
      %p124 = scmp.ne.s32.totalorder %s109, %s123
      %p125 = scmp.eq.s32.totalorder %s31, 0
      %p126 = por %p124, %p125
      %s128 = sadd.s32 %s127, 1
      %p131 = scmp.eq.s32.totalorder %s25, 1
      %p132 = scmp.ne.s32.totalorder %s127, %s129
      %p133 = scmp.eq.s32.totalorder %s25, 0
      %p134 = por %p132, %p133
      %p135 = scmp.ne.s32.totalorder %s127, %s129
      %p136 = scmp.eq.s32.totalorder %s30, 1
      %p137 = por %p135, %p136
      %p138 = scmp.ne.s32.totalorder %s129, %s130
      %p139 = scmp.eq.s32.totalorder %s30, 0
      %p140 = por %p138, %p139
      %p141 = scmp.ne.s32.totalorder %s129, %s130
      %p142 = scmp.eq.s32.totalorder %s31, 1
      %p143 = por %p141, %p142
      %p145 = scmp.ne.s32.totalorder %s130, %s144
      %p146 = scmp.eq.s32.totalorder %s31, 0
      %p147 = por %p145, %p146
      %s149 = sadd.s32 %s148, 1
      %p152 = scmp.eq.s32.totalorder %s25, 1
      %p153 = scmp.ne.s32.totalorder %s148, %s150
      %p154 = scmp.eq.s32.totalorder %s25, 0
      %p155 = por %p153, %p154
      %p156 = scmp.ne.s32.totalorder %s148, %s150
      %p157 = scmp.eq.s32.totalorder %s30, 1
      %p158 = por %p156, %p157
      %p159 = scmp.ne.s32.totalorder %s150, %s151
      %p160 = scmp.eq.s32.totalorder %s30, 0
      %p161 = por %p159, %p160
      %p162 = scmp.ne.s32.totalorder %s150, %s151
      %p163 = scmp.eq.s32.totalorder %s31, 1
      %p164 = por %p162, %p163
      %p166 = scmp.ne.s32.totalorder %s151, %s165
      %p167 = scmp.eq.s32.totalorder %s31, 0
      %p168 = por %p166, %p167
      %s170 = sadd.s32 %s169, 1
      %p173 = scmp.eq.s32.totalorder %s25, 1
      %p174 = scmp.ne.s32.totalorder %s169, %s171
      %p175 = scmp.eq.s32.totalorder %s25, 0
      %p176 = por %p174, %p175
      %p177 = scmp.ne.s32.totalorder %s169, %s171
      %p178 = scmp.eq.s32.totalorder %s30, 1
      %p179 = por %p177, %p178
      %p180 = scmp.ne.s32.totalorder %s171, %s172
      %p181 = scmp.eq.s32.totalorder %s30, 0
      %p182 = por %p180, %p181
      %p183 = scmp.ne.s32.totalorder %s171, %s172
      %p184 = scmp.eq.s32.totalorder %s31, 1
      %p185 = por %p183, %p184
      %p187 = scmp.ne.s32.totalorder %s172, %s186
      %p188 = scmp.eq.s32.totalorder %s31, 0
      %p189 = por %p187, %p188
      %s191 = sadd.s32 %s190, 1
      %p194 = scmp.eq.s32.totalorder %s25, 1
      %p195 = scmp.ne.s32.totalorder %s190, %s192
      %p196 = scmp.eq.s32.totalorder %s25, 0
      %p197 = por %p195, %p196
      %p198 = scmp.ne.s32.totalorder %s190, %s192
      %p199 = scmp.eq.s32.totalorder %s30, 1
      %p200 = por %p198, %p199
      %p201 = scmp.ne.s32.totalorder %s192, %s193
      %p202 = scmp.eq.s32.totalorder %s30, 0
      %p203 = por %p201, %p202
      %p204 = scmp.ne.s32.totalorder %s192, %s193
      %p205 = scmp.eq.s32.totalorder %s31, 1
      %p206 = por %p204, %p205
      %p208 = scmp.ne.s32.totalorder %s193, %s207
      %p209 = scmp.eq.s32.totalorder %s31, 0
      %p210 = por %p208, %p209
      %s211 = ssub.s32 %s25, %s32
      %p212 = scmp.eq.s32.totalorder %s211, 0
      %s214 = sadd.s32 %s213, 1
      %s215 = scalar_select %p212, %s213, %s214
      %p218 = pneg %p212
      %p219 = scmp.eq.s32.totalorder %s25, 1
      %p220 = por %p218, %p219
      %p221 = scmp.ne.s32.totalorder %s213, %s216
      %p222 = scmp.eq.s32.totalorder %s25, 0
      %p223 = por %p221, %p222
      %p224 = scmp.ne.s32.totalorder %s213, %s216
      %p225 = scmp.eq.s32.totalorder %s30, 1
      %p226 = por %p224, %p225
      %p227 = scmp.ne.s32.totalorder %s216, %s217
      %p228 = scmp.eq.s32.totalorder %s30, 0
      %p229 = por %p227, %p228
      %p230 = scmp.ne.s32.totalorder %s216, %s217
      %p231 = scmp.eq.s32.totalorder %s31, 1
      %p232 = por %p230, %p231
      %p234 = scmp.ne.s32.totalorder %s217, %s233
      %p235 = scmp.eq.s32.totalorder %s31, 0
      %p236 = por %p234, %p235
      %p237 = scmp.le.s32.totalorder 1, %s25
      %p238 = scmp.lt.s32.totalorder %s25, 3
      %p239 = pnand %p237, %p238
      %p240 = pneg %p239
      // Predicated region
      $region9: #{tpu_custom_call.1} parent=5 // pred_check
        _
      $region10: #{tpu_custom_call.1} parent=5 // pred_check_branch
        %242 = sbr.rel (%p239) target = $region12
      $region11: #{tpu_custom_call.1} parent=5 // pred_region
        %s243 = ssub.s32 %s25, 1
        // Predicated region
        $region13: #{tpu_custom_call.1} parent=11 // pred_check
          %p244 = pneg %p98
        $region14: #{tpu_custom_call.1} parent=11 // pred_check_branch
          %246 = sbr.rel (%p244) target = $region16
        $region15: #{tpu_custom_call.1} parent=11 // pred_region
          %248 = vsyncadd [#allocation6], 0
          %s249 = sshll.u32 %s2, 4
          %s250 = int_to_ptr.hbm [resolvable:$true] %s249
          %s251 = sshll.u32 [#allocation7], 4
          %s252 = int_to_ptr.vmem [resolvable:$true] %s251
          %257 = dma.hbm_to_vmem [thread:$0]  %s250, 12288, %s252, [#allocation6], 384, 384, 24
        $region16: #{tpu_custom_call.1} parent=11 // pred_fallthru
          _
        // Predicated region
        $region17: #{tpu_custom_call.1} parent=11 // pred_check
          %p258 = pneg %p119
        $region18: #{tpu_custom_call.1} parent=11 // pred_check_branch
          %260 = sbr.rel (%p258) target = $region20
        $region19: #{tpu_custom_call.1} parent=11 // pred_region
          %262 = vsyncadd [#allocation9], 0
          %s263 = sshll.u32 %s3, 4
          %s264 = int_to_ptr.hbm [resolvable:$true] %s263
          %s265 = sshll.u32 [#allocation8], 4
          %s266 = int_to_ptr.vmem [resolvable:$true] %s265
          %271 = dma.hbm_to_vmem [thread:$0]  %s264, 96, %s266, [#allocation9], 48, 48, 3
        $region20: #{tpu_custom_call.1} parent=11 // pred_fallthru
          _
        // Predicated region
        $region21: #{tpu_custom_call.1} parent=11 // pred_check
          %p272 = pneg %p140
        $region22: #{tpu_custom_call.1} parent=11 // pred_check_branch
          %274 = sbr.rel (%p272) target = $region24
        $region23: #{tpu_custom_call.1} parent=11 // pred_region
          %276 = vsyncadd [#allocation9], 0
          %s277 = sshll.u32 %s4, 4
          %s278 = int_to_ptr.hbm [resolvable:$true] %s277
          %s279 = sshll.u32 [#allocation10], 4
          %s280 = int_to_ptr.vmem [resolvable:$true] %s279
          %285 = dma.hbm_to_vmem [thread:$0]  %s278, 4096, %s280, [#allocation9], 128, 128, 8
        $region24: #{tpu_custom_call.1} parent=11 // pred_fallthru
          _
        // Predicated region
        $region25: #{tpu_custom_call.1} parent=11 // pred_check
          %p286 = pneg %p161
        $region26: #{tpu_custom_call.1} parent=11 // pred_check_branch
          %288 = sbr.rel (%p286) target = $region28
        $region27: #{tpu_custom_call.1} parent=11 // pred_region
          _
        $region28: #{tpu_custom_call.1} parent=11 // pred_fallthru
          _
        // Predicated region
        $region29: #{tpu_custom_call.1} parent=11 // pred_check
          %p289 = pneg %p182
        $region30: #{tpu_custom_call.1} parent=11 // pred_check_branch
          %291 = sbr.rel (%p289) target = $region32
        $region31: #{tpu_custom_call.1} parent=11 // pred_region
          %293 = vsyncadd [#allocation12], 0
          %s294 = sshll.u32 %s6, 4
          %s295 = int_to_ptr.hbm [resolvable:$true] %s294
          %s296 = sshll.u32 [#allocation11], 4
          %s297 = int_to_ptr.vmem [resolvable:$true] %s296
          %302 = dma.hbm_to_vmem [thread:$0]  %s295, 4096, %s297, [#allocation12], 128, 128, 8
        $region32: #{tpu_custom_call.1} parent=11 // pred_fallthru
          _
        // Predicated region
        $region33: #{tpu_custom_call.1} parent=11 // pred_check
          %p303 = pneg %p203
        $region34: #{tpu_custom_call.1} parent=11 // pred_check_branch
          %305 = sbr.rel (%p303) target = $region36
        $region35: #{tpu_custom_call.1} parent=11 // pred_region
          _
        $region36: #{tpu_custom_call.1} parent=11 // pred_fallthru
          _
      $region12: #{tpu_custom_call.1} parent=5 // pred_fallthru
        _
      %p306 = scmp.lt.s32.totalorder %s25, 2
      // Predicated region
      $region37: #{tpu_custom_call.1} parent=5 // pred_check
        %p307 = pneg %p306
      $region38: #{tpu_custom_call.1} parent=5 // pred_check_branch
        %309 = sbr.rel (%p307) target = $region40
      $region39: #{tpu_custom_call.1} parent=5 // pred_region
        // Predicated region
        $region41: #{tpu_custom_call.1} parent=39 // pred_check
          %p310 = pneg %p45
        $region42: #{tpu_custom_call.1} parent=39 // pred_check_branch
          %312 = sbr.rel (%p310) target = $region44
        $region43: #{tpu_custom_call.1} parent=39 // pred_region
          %s313 = sand.u32 %s35, 1
          %s314 = scalar_lea.sflag [#allocation3], %s313
          %s315 = sand.u32 %s35, 1
          %s316 = smul.addr %s315, 8
          %s317 = scalar_lea.vmem [#allocation2], %s316
          %319 = vsyncadd %s314, 0
          %s320 = smul.addr %s25, 8
          %s321 = scalar_lea.hbm %s0, %s320
          %s323 = sshll.u32 %s321, 4
          %s324 = int_to_ptr.hbm [resolvable:$true] %s323
          %s325 = sshll.u32 %s317, 4
          %s326 = int_to_ptr.vmem [resolvable:$true] %s325
          %328 = dma.hbm_to_vmem [thread:$0]  %s324, 128, %s326, %s314
        $region44: #{tpu_custom_call.1} parent=39 // pred_fallthru
          _
        // Predicated region
        $region45: #{tpu_custom_call.1} parent=39 // pred_check
          %p329 = pneg %p71
        $region46: #{tpu_custom_call.1} parent=39 // pred_check_branch
          %331 = sbr.rel (%p329) target = $region48
        $region47: #{tpu_custom_call.1} parent=39 // pred_region
          %s332 = sand.u32 %s25, 1
          %s333 = scalar_lea.sflag [#allocation6], %s332
          %s334 = sand.u32 %s61, 1
          %s335 = smul.addr %s334, 8
          %s336 = scalar_lea.vmem [#allocation5], %s335
          %338 = vsyncadd %s333, 0
          %s339 = smul.addr %s25, 8
          %s340 = scalar_lea.hbm %s1, %s339
          %s342 = sshll.u32 %s340, 4
          %s343 = int_to_ptr.hbm [resolvable:$true] %s342
          %s344 = sshll.u32 %s336, 4
          %s345 = int_to_ptr.vmem [resolvable:$true] %s344
          %347 = dma.hbm_to_vmem [thread:$0]  %s343, 128, %s345, %s333
        $region48: #{tpu_custom_call.1} parent=39 // pred_fallthru
          _
      $region40: #{tpu_custom_call.1} parent=5 // pred_fallthru
        _
      %p348 = scmp.le.s32.totalorder 1, %s25
      %p349 = scmp.lt.s32.totalorder %s25, 3
      %p350 = pnand %p348, %p349
      %p351 = pneg %p350
      // Predicated region
      $region49: #{tpu_custom_call.1} parent=5 // pred_check
        _
      $region50: #{tpu_custom_call.1} parent=5 // pred_check_branch
        %353 = sbr.rel (%p350) target = $region52
      $region51: #{tpu_custom_call.1} parent=5 // pred_region
        %s354 = ssub.s32 %s25, 1
        %s355 = sand.u32 %s38, 1
        %s356 = scalar_lea.sflag [#allocation3], %s355
        %s357 = sand.u32 %s38, 1
        %s358 = smul.addr %s357, 8
        %s359 = scalar_lea.vmem [#allocation2], %s358
        // Predicated region
        $region53: #{tpu_custom_call.1} parent=51 // pred_check
          %p360 = pneg %p51
        $region54: #{tpu_custom_call.1} parent=51 // pred_check_branch
          %362 = sbr.rel (%p360) target = $region56
        $region55: #{tpu_custom_call.1} parent=51 // pred_region
          %364 = dma.done %s356, 128
        $region56: #{tpu_custom_call.1} parent=51 // pred_fallthru
          _
        %s365 = sand.u32 %s30, 1
        %s366 = scalar_lea.sflag [#allocation6], %s365
        %s367 = sand.u32 %s64, 1
        %s368 = smul.addr %s367, 8
        %s369 = scalar_lea.vmem [#allocation5], %s368
        // Predicated region
        $region57: #{tpu_custom_call.1} parent=51 // pred_check
          %p370 = pneg %p77
        $region58: #{tpu_custom_call.1} parent=51 // pred_check_branch
          %372 = sbr.rel (%p370) target = $region60
        $region59: #{tpu_custom_call.1} parent=51 // pred_region
          %374 = dma.done %s366, 128
        $region60: #{tpu_custom_call.1} parent=51 // pred_fallthru
          _
        // Predicated region
        $region61: #{tpu_custom_call.1} parent=51 // pred_check
          %p375 = pneg %p98
        $region62: #{tpu_custom_call.1} parent=51 // pred_check_branch
          %377 = sbr.rel (%p375) target = $region64
        $region63: #{tpu_custom_call.1} parent=51 // pred_region
          %379 = dma.done [#allocation6], 12288
        $region64: #{tpu_custom_call.1} parent=51 // pred_fallthru
          _
        // Predicated region
        $region65: #{tpu_custom_call.1} parent=51 // pred_check
          %p380 = pneg %p119
        $region66: #{tpu_custom_call.1} parent=51 // pred_check_branch
          %382 = sbr.rel (%p380) target = $region68
        $region67: #{tpu_custom_call.1} parent=51 // pred_region
          %384 = dma.done [#allocation9], 96
        $region68: #{tpu_custom_call.1} parent=51 // pred_fallthru
          _
        // Predicated region
        $region69: #{tpu_custom_call.1} parent=51 // pred_check
          %p385 = pneg %p140
        $region70: #{tpu_custom_call.1} parent=51 // pred_check_branch
          %387 = sbr.rel (%p385) target = $region72
        $region71: #{tpu_custom_call.1} parent=51 // pred_region
          %389 = dma.done [#allocation9], 4096
        $region72: #{tpu_custom_call.1} parent=51 // pred_fallthru
          _
        // Predicated region
        $region73: #{tpu_custom_call.1} parent=51 // pred_check
          %p390 = pneg %p182
        $region74: #{tpu_custom_call.1} parent=51 // pred_check_branch
          %392 = sbr.rel (%p390) target = $region76
        $region75: #{tpu_custom_call.1} parent=51 // pred_region
          %394 = dma.done [#allocation12], 4096
        $region76: #{tpu_custom_call.1} parent=51 // pred_fallthru
          _
        %s395 = sand.u32 %s38, 1
        %s396 = scalar_lea.sflag [#allocation3], %s395
        %s397 = sand.u32 %s38, 1
        %s398 = smul.addr %s397, 8
        %s399 = scalar_lea.vmem [#allocation2], %s398
        %p400 = pneg %p51
        %p401 = pneg %p48
        %s402 = sand.u32 %s30, 1
        %s403 = scalar_lea.sflag [#allocation6], %s402
        %s404 = sand.u32 %s64, 1
        %s405 = smul.addr %s404, 8
        %s406 = scalar_lea.vmem [#allocation5], %s405
        %p407 = pneg %p77
        %p408 = pneg %p74
        %p409 = pneg %p98
        %p410 = pneg %p95
        %p411 = pneg %p119
        %p412 = pneg %p116
        %p413 = pneg %p140
        %p414 = pneg %p137
        %p415 = pneg %p161
        %p416 = pneg %p158
        %p417 = pneg %p182
        %p418 = pneg %p179
        %p419 = pneg %p203
        %p420 = pneg %p200
        %p421 = pneg %p229
        %p422 = pneg %p226
        %s423 = sand.u32 %s216, 1
        %s424 = scalar_lea.sflag [#allocation4], %s423
        %s425 = sand.u32 %s216, 1
        %s426 = smul.addr %s425, 8
        %s427 = scalar_lea.vmem [#allocation13], %s426
        %v428 = vld [vmem:[%s359] sm:$0xff]
        %v429 = vld [vmem:[%s369] sm:$0xff]
        %v430 = vxor.u32 %v429, 2147483648
        %v431 = vmul.f32 %v430, 1.442695
        %v432 = vpow.pop %v431
        %v433 = vadd.f32 %v432, 1.0
        %v434 = vrcp.pop %v433
        %v435 = vmul.f32 %v433, %v434
        %v436 = vsub.f32 1.0, %v435
        %v437 = vmul.f32 %v434, %v436
        %v438 = vadd.f32 %v434, %v437
        %vm439 = vweird.f32 %v433
        %vm440 = vweird.f32 %v434
        %vm441 = vmor %vm439, %vm440
        %v442 = vsel %vm441, %v434, %v438
        %v443 = vand.u32 2147483647, %v433
        %vm444 = vcmp.eq.f32.partialorder %v443, 8.507059e+37
        %v445 = vand.u32 %v433, 2147483648
        %v446 = vor.u32 1.1754944e-38, %v445
        %v447 = vsel %vm444, %v446, %v442
        %v448 = vmul.f32 1.0, %v447
        %v449 = vmul.f32 %v429, %v448
        %v450 = vld [vmem:[#allocation7] sm:$0xff]
        %v451 = vld [vmem:[#allocation7 + $0x8] sm:$0xff]
        %v452 = vld [vmem:[#allocation7 + $0x10] sm:$0xff]
        %v453 = vld [vmem:[#allocation7 + $0x18] sm:$0xff]
        %v454 = vld [vmem:[#allocation7 + $0x20] sm:$0xff]
        %v455 = vld [vmem:[#allocation7 + $0x28] sm:$0xff]
        %v456 = vld [vmem:[#allocation7 + $0x30] sm:$0xff]
        %v457 = vld [vmem:[#allocation7 + $0x38] sm:$0xff]
        %v458 = vld [vmem:[#allocation7 + $0x40] sm:$0xff]
        %v459 = vld [vmem:[#allocation7 + $0x48] sm:$0xff]
        %v460 = vld [vmem:[#allocation7 + $0x50] sm:$0xff]
        %v461 = vld [vmem:[#allocation7 + $0x58] sm:$0xff]
        %v462 = vld [vmem:[#allocation7 + $0x60] sm:$0xff]
        %v463 = vld [vmem:[#allocation7 + $0x68] sm:$0xff]
        %v464 = vld [vmem:[#allocation7 + $0x70] sm:$0xff]
        %v465 = vld [vmem:[#allocation7 + $0x78] sm:$0xff]
        %v466 = vld [vmem:[#allocation7 + $0x80] sm:$0xff]
        %v467 = vld [vmem:[#allocation7 + $0x88] sm:$0xff]
        %v468 = vld [vmem:[#allocation7 + $0x90] sm:$0xff]
        %v469 = vld [vmem:[#allocation7 + $0x98] sm:$0xff]
        %v470 = vld [vmem:[#allocation7 + $0xa0] sm:$0xff]
        %v471 = vld [vmem:[#allocation7 + $0xa8] sm:$0xff]
        %v472 = vld [vmem:[#allocation7 + $0xb0] sm:$0xff]
        %v473 = vld [vmem:[#allocation7 + $0xb8] sm:$0xff]
        %v474 = vld [vmem:[#allocation7 + $0xc0] sm:$0xff]
        %v475 = vld [vmem:[#allocation7 + $0xc8] sm:$0xff]
        %v476 = vld [vmem:[#allocation7 + $0xd0] sm:$0xff]
        %v477 = vld [vmem:[#allocation7 + $0xd8] sm:$0xff]
        %v478 = vld [vmem:[#allocation7 + $0xe0] sm:$0xff]
        %v479 = vld [vmem:[#allocation7 + $0xe8] sm:$0xff]
        %v480 = vld [vmem:[#allocation7 + $0xf0] sm:$0xff]
        %v481 = vld [vmem:[#allocation7 + $0xf8] sm:$0xff]
        %v482 = vld [vmem:[#allocation7 + $0x100] sm:$0xff]
        %v483 = vld [vmem:[#allocation7 + $0x108] sm:$0xff]
        %v484 = vld [vmem:[#allocation7 + $0x110] sm:$0xff]
        %v485 = vld [vmem:[#allocation7 + $0x118] sm:$0xff]
        %v486 = vld [vmem:[#allocation7 + $0x120] sm:$0xff]
        %v487 = vld [vmem:[#allocation7 + $0x128] sm:$0xff]
        %v488 = vld [vmem:[#allocation7 + $0x130] sm:$0xff]
        %v489 = vld [vmem:[#allocation7 + $0x138] sm:$0xff]
        %v490 = vld [vmem:[#allocation7 + $0x140] sm:$0xff]
        %v491 = vld [vmem:[#allocation7 + $0x148] sm:$0xff]
        %v492 = vld [vmem:[#allocation7 + $0x150] sm:$0xff]
        %v493 = vld [vmem:[#allocation7 + $0x158] sm:$0xff]
        %v494 = vld [vmem:[#allocation7 + $0x160] sm:$0xff]
        %v495 = vld [vmem:[#allocation7 + $0x168] sm:$0xff]
        %v496 = vld [vmem:[#allocation7 + $0x170] sm:$0xff]
        %v497 = vld [vmem:[#allocation7 + $0x178] sm:$0xff]
        %v498 = vld [vmem:[#allocation8] sm:$0x7]
        %v500 = vperm.slane %v498, 0
        %v501 = vperm.slane %v498, 1
        %v502 = vperm.slane %v498, 2
        %506 = vmatpush.msra.mxu0 %v495
        %507 = vmatpush.msra.mxu0 %v492
        %508 = vmatpush.msra.mxu0 %v489
        %509 = vmatpush.msra.mxu0 %v486
        %510 = vmatpush.msra.mxu0 %v483
        %511 = vmatpush.msra.mxu0 %v480
        %512 = vmatpush.msra.mxu0 %v477
        %513 = vmatpush.msra.mxu0 %v474
        %514 = vmatpush.msra.mxu0 %v471
        %515 = vmatpush.msra.mxu0 %v468
        %516 = vmatpush.msra.mxu0 %v465
        %517 = vmatpush.msra.mxu0 %v462
        %518 = vmatpush.msra.mxu0 %v459
        %519 = vmatpush.msra.mxu0 %v456
        %520 = vmatpush.msra.mxu0 %v453
        %521 = vmatpush.msra.mxu0 %v450
        %522 = vmatmul.f32.gmra.mxu0 %v449
        %v523 = vpop.f32.mrf.mxu0
        %v524 = vadd.f32 %v500, %v523
        %525 = vdwg.mxu0
        %526 = vmatpush.msra.mxu0 %v496
        %527 = vmatpush.msra.mxu0 %v493
        %528 = vmatpush.msra.mxu0 %v490
        %529 = vmatpush.msra.mxu0 %v487
        %530 = vmatpush.msra.mxu0 %v484
        %531 = vmatpush.msra.mxu0 %v481
        %532 = vmatpush.msra.mxu0 %v478
        %533 = vmatpush.msra.mxu0 %v475
        %534 = vmatpush.msra.mxu0 %v472
        %535 = vmatpush.msra.mxu0 %v469
        %536 = vmatpush.msra.mxu0 %v466
        %537 = vmatpush.msra.mxu0 %v463
        %538 = vmatpush.msra.mxu0 %v460
        %539 = vmatpush.msra.mxu0 %v457
        %540 = vmatpush.msra.mxu0 %v454
        %541 = vmatpush.msra.mxu0 %v451
        %542 = vmatmul.f32.gmra.mxu0 %v449
        %v543 = vpop.f32.mrf.mxu0
        %v544 = vadd.f32 %v501, %v543
        %545 = vdwg.mxu0
        %546 = vmatpush.msra.mxu0 %v497
        %547 = vmatpush.msra.mxu0 %v494
        %548 = vmatpush.msra.mxu0 %v491
        %549 = vmatpush.msra.mxu0 %v488
        %550 = vmatpush.msra.mxu0 %v485
        %551 = vmatpush.msra.mxu0 %v482
        %552 = vmatpush.msra.mxu0 %v479
        %553 = vmatpush.msra.mxu0 %v476
        %554 = vmatpush.msra.mxu0 %v473
        %555 = vmatpush.msra.mxu0 %v470
        %556 = vmatpush.msra.mxu0 %v467
        %557 = vmatpush.msra.mxu0 %v464
        %558 = vmatpush.msra.mxu0 %v461
        %559 = vmatpush.msra.mxu0 %v458
        %560 = vmatpush.msra.mxu0 %v455
        %561 = vmatpush.msra.mxu0 %v452
        %562 = vmatmul.f32.gmra.mxu0 %v449
        %v563 = vpop.f32.mrf.mxu0
        %v564 = vadd.f32 %v502, %v563
        %565 = vdwg.mxu0
        %566 = vadd.xlane.f32.xlu0 %v428
        %v567 = vpop.xlane.xlu0 %566
        %v568 = vmul.f32 %v428, %v428
        %569 = vadd.xlane.f32.xlu0 %v568
        %v570 = vpop.xlane.xlu0 %569
        %v571 = vmul.f32 %v567, 0.03125
        %v572 = vmul.f32 %v570, 0.03125
        %v573 = vmul.f32 %v571, %v571
        %v574 = vsub.f32 %v572, %v573
        %v575 = vmax.f32 %v574, 0.0
        %v576 = vsub.f32 %v428, %v571
        %v577 = vadd.f32 %v575, 1e-06
        %v578 = vrsqrt.pop %v577
        %v579 = vmul.f32 %v578, %v577
        %v580 = vmul.f32 %v579, %v578
        %v581 = vmul.f32 0.5, %v580
        %v582 = vsub.f32 1.5, %v581
        %v583 = vmul.f32 %v578, %v582
        %vm584 = vweird.f32 %v577
        %vm585 = vweird.f32 %v578
        %vm586 = vmor %vm584, %vm585
        %v587 = vsel %vm586, %v578, %v583
        %v588 = vmul.f32 %v576, %v587
        %v589 = vadd.f32 %v544, 1.0
        %v590 = vmul.f32 %v588, %v589
        %v591 = vadd.f32 %v590, %v524
        %v592 = vld [vmem:[#allocation10] sm:$0xff]
        %v593 = vld [vmem:[#allocation10 + $0x8] sm:$0xff]
        %v594 = vld [vmem:[#allocation10 + $0x10] sm:$0xff]
        %v595 = vld [vmem:[#allocation10 + $0x18] sm:$0xff]
        %v596 = vld [vmem:[#allocation10 + $0x20] sm:$0xff]
        %v597 = vld [vmem:[#allocation10 + $0x28] sm:$0xff]
        %v598 = vld [vmem:[#allocation10 + $0x30] sm:$0xff]
        %v599 = vld [vmem:[#allocation10 + $0x38] sm:$0xff]
        %v600 = vld [vmem:[#allocation10 + $0x40] sm:$0xff]
        %v601 = vld [vmem:[#allocation10 + $0x48] sm:$0xff]
        %v602 = vld [vmem:[#allocation10 + $0x50] sm:$0xff]
        %v603 = vld [vmem:[#allocation10 + $0x58] sm:$0xff]
        %v604 = vld [vmem:[#allocation10 + $0x60] sm:$0xff]
        %v605 = vld [vmem:[#allocation10 + $0x68] sm:$0xff]
        %v606 = vld [vmem:[#allocation10 + $0x70] sm:$0xff]
        %v607 = vld [vmem:[#allocation10 + $0x78] sm:$0xff]
        %v608 = vld [vmem:[%s5] sm:$0x1]
        %v610 = vperm.slane %v608, 0
        %612 = vmatpush.msra.mxu0 %v607
        %613 = vmatpush.msra.mxu0 %v606
        %614 = vmatpush.msra.mxu0 %v605
        %615 = vmatpush.msra.mxu0 %v604
        %616 = vmatpush.msra.mxu0 %v603
        %617 = vmatpush.msra.mxu0 %v602
        %618 = vmatpush.msra.mxu0 %v601
        %619 = vmatpush.msra.mxu0 %v600
        %620 = vmatpush.msra.mxu0 %v599
        %621 = vmatpush.msra.mxu0 %v598
        %622 = vmatpush.msra.mxu0 %v597
        %623 = vmatpush.msra.mxu0 %v596
        %624 = vmatpush.msra.mxu0 %v595
        %625 = vmatpush.msra.mxu0 %v594
        %626 = vmatpush.msra.mxu0 %v593
        %627 = vmatpush.msra.mxu0 %v592
        %628 = vmatmul.f32.gmra.mxu0 %v591
        %v629 = vpop.f32.mrf.mxu0
        %v630 = vadd.f32 %v610, %v629
        %631 = vdwg.mxu0
        %v632 = vmax.f32 %v630, 0.0
        %v633 = vld [vmem:[#allocation11] sm:$0xff]
        %v634 = vld [vmem:[#allocation11 + $0x8] sm:$0xff]
        %v635 = vld [vmem:[#allocation11 + $0x10] sm:$0xff]
        %v636 = vld [vmem:[#allocation11 + $0x18] sm:$0xff]
        %v637 = vld [vmem:[#allocation11 + $0x20] sm:$0xff]
        %v638 = vld [vmem:[#allocation11 + $0x28] sm:$0xff]
        %v639 = vld [vmem:[#allocation11 + $0x30] sm:$0xff]
        %v640 = vld [vmem:[#allocation11 + $0x38] sm:$0xff]
        %v641 = vld [vmem:[#allocation11 + $0x40] sm:$0xff]
        %v642 = vld [vmem:[#allocation11 + $0x48] sm:$0xff]
        %v643 = vld [vmem:[#allocation11 + $0x50] sm:$0xff]
        %v644 = vld [vmem:[#allocation11 + $0x58] sm:$0xff]
        %v645 = vld [vmem:[#allocation11 + $0x60] sm:$0xff]
        %v646 = vld [vmem:[#allocation11 + $0x68] sm:$0xff]
        %v647 = vld [vmem:[#allocation11 + $0x70] sm:$0xff]
        %v648 = vld [vmem:[#allocation11 + $0x78] sm:$0xff]
        %v649 = vld [vmem:[%s7] sm:$0x1]
        %v651 = vperm.slane %v649, 0
        %653 = vmatpush.msra.mxu0 %v648
        %654 = vmatpush.msra.mxu0 %v647
        %655 = vmatpush.msra.mxu0 %v646
        %656 = vmatpush.msra.mxu0 %v645
        %657 = vmatpush.msra.mxu0 %v644
        %658 = vmatpush.msra.mxu0 %v643
        %659 = vmatpush.msra.mxu0 %v642
        %660 = vmatpush.msra.mxu0 %v641
        %661 = vmatpush.msra.mxu0 %v640
        %662 = vmatpush.msra.mxu0 %v639
        %663 = vmatpush.msra.mxu0 %v638
        %664 = vmatpush.msra.mxu0 %v637
        %665 = vmatpush.msra.mxu0 %v636
        %666 = vmatpush.msra.mxu0 %v635
        %667 = vmatpush.msra.mxu0 %v634
        %668 = vmatpush.msra.mxu0 %v633
        %669 = vmatmul.f32.gmra.mxu0 %v632
        %v670 = vpop.f32.mrf.mxu0
        %v671 = vadd.f32 %v651, %v670
        %672 = vdwg.mxu0
        %v673 = vmul.f32 %v564, %v671
        %v674 = vadd.f32 %v428, %v673
        %s675 = scalar_lea.vmem [#allocation7], 384
        %v676 = vld [vmem:[%s675] sm:$0xff]
        %v677 = vld [vmem:[%s675 + $0x8] sm:$0xff]
        %v678 = vld [vmem:[%s675 + $0x10] sm:$0xff]
        %v679 = vld [vmem:[%s675 + $0x18] sm:$0xff]
        %v680 = vld [vmem:[%s675 + $0x20] sm:$0xff]
        %v681 = vld [vmem:[%s675 + $0x28] sm:$0xff]
        %v682 = vld [vmem:[%s675 + $0x30] sm:$0xff]
        %v683 = vld [vmem:[%s675 + $0x38] sm:$0xff]
        %v684 = vld [vmem:[%s675 + $0x40] sm:$0xff]
        %v685 = vld [vmem:[%s675 + $0x48] sm:$0xff]
        %v686 = vld [vmem:[%s675 + $0x50] sm:$0xff]
        %v687 = vld [vmem:[%s675 + $0x58] sm:$0xff]
        %v688 = vld [vmem:[%s675 + $0x60] sm:$0xff]
        %v689 = vld [vmem:[%s675 + $0x68] sm:$0xff]
        %v690 = vld [vmem:[%s675 + $0x70] sm:$0xff]
        %v691 = vld [vmem:[%s675 + $0x78] sm:$0xff]
        %v692 = vld [vmem:[%s675 + $0x80] sm:$0xff]
        %v693 = vld [vmem:[%s675 + $0x88] sm:$0xff]
        %v694 = vld [vmem:[%s675 + $0x90] sm:$0xff]
        %v695 = vld [vmem:[%s675 + $0x98] sm:$0xff]
        %v696 = vld [vmem:[%s675 + $0xa0] sm:$0xff]
        %v697 = vld [vmem:[%s675 + $0xa8] sm:$0xff]
        %v698 = vld [vmem:[%s675 + $0xb0] sm:$0xff]
        %v699 = vld [vmem:[%s675 + $0xb8] sm:$0xff]
        %v700 = vld [vmem:[%s675 + $0xc0] sm:$0xff]
        %v701 = vld [vmem:[%s675 + $0xc8] sm:$0xff]
        %v702 = vld [vmem:[%s675 + $0xd0] sm:$0xff]
        %v703 = vld [vmem:[%s675 + $0xd8] sm:$0xff]
        %v704 = vld [vmem:[%s675 + $0xe0] sm:$0xff]
        %v705 = vld [vmem:[%s675 + $0xe8] sm:$0xff]
        %v706 = vld [vmem:[%s675 + $0xf0] sm:$0xff]
        %v707 = vld [vmem:[%s675 + $0xf8] sm:$0xff]
        %v708 = vld [vmem:[%s675 + $0x100] sm:$0xff]
        %v709 = vld [vmem:[%s675 + $0x108] sm:$0xff]
        %v710 = vld [vmem:[%s675 + $0x110] sm:$0xff]
        %v711 = vld [vmem:[%s675 + $0x118] sm:$0xff]
        %v712 = vld [vmem:[%s675 + $0x120] sm:$0xff]
        %v713 = vld [vmem:[%s675 + $0x128] sm:$0xff]
        %v714 = vld [vmem:[%s675 + $0x130] sm:$0xff]
        %v715 = vld [vmem:[%s675 + $0x138] sm:$0xff]
        %v716 = vld [vmem:[%s675 + $0x140] sm:$0xff]
        %v717 = vld [vmem:[%s675 + $0x148] sm:$0xff]
        %v718 = vld [vmem:[%s675 + $0x150] sm:$0xff]
        %v719 = vld [vmem:[%s675 + $0x158] sm:$0xff]
        %v720 = vld [vmem:[%s675 + $0x160] sm:$0xff]
        %v721 = vld [vmem:[%s675 + $0x168] sm:$0xff]
        %v722 = vld [vmem:[%s675 + $0x170] sm:$0xff]
        %v723 = vld [vmem:[%s675 + $0x178] sm:$0xff]
        %s724 = scalar_lea.vmem [#allocation8], 3
        %v725 = vld [vmem:[%s724] sm:$0x7]
        %v727 = vperm.slane %v725, 0
        %v728 = vperm.slane %v725, 1
        %v729 = vperm.slane %v725, 2
        %733 = vmatpush.msra.mxu0 %v721
        %734 = vmatpush.msra.mxu0 %v718
        %735 = vmatpush.msra.mxu0 %v715
        %736 = vmatpush.msra.mxu0 %v712
        %737 = vmatpush.msra.mxu0 %v709
        %738 = vmatpush.msra.mxu0 %v706
        %739 = vmatpush.msra.mxu0 %v703
        %740 = vmatpush.msra.mxu0 %v700
        %741 = vmatpush.msra.mxu0 %v697
        %742 = vmatpush.msra.mxu0 %v694
        %743 = vmatpush.msra.mxu0 %v691
        %744 = vmatpush.msra.mxu0 %v688
        %745 = vmatpush.msra.mxu0 %v685
        %746 = vmatpush.msra.mxu0 %v682
        %747 = vmatpush.msra.mxu0 %v679
        %748 = vmatpush.msra.mxu0 %v676
        %749 = vmatmul.f32.gmra.mxu0 %v449
        %v750 = vpop.f32.mrf.mxu0
        %v751 = vadd.f32 %v727, %v750
        %752 = vdwg.mxu0
        %753 = vmatpush.msra.mxu0 %v722
        %754 = vmatpush.msra.mxu0 %v719
        %755 = vmatpush.msra.mxu0 %v716
        %756 = vmatpush.msra.mxu0 %v713
        %757 = vmatpush.msra.mxu0 %v710
        %758 = vmatpush.msra.mxu0 %v707
        %759 = vmatpush.msra.mxu0 %v704
        %760 = vmatpush.msra.mxu0 %v701
        %761 = vmatpush.msra.mxu0 %v698
        %762 = vmatpush.msra.mxu0 %v695
        %763 = vmatpush.msra.mxu0 %v692
        %764 = vmatpush.msra.mxu0 %v689
        %765 = vmatpush.msra.mxu0 %v686
        %766 = vmatpush.msra.mxu0 %v683
        %767 = vmatpush.msra.mxu0 %v680
        %768 = vmatpush.msra.mxu0 %v677
        %769 = vmatmul.f32.gmra.mxu0 %v449
        %v770 = vpop.f32.mrf.mxu0
        %v771 = vadd.f32 %v728, %v770
        %772 = vdwg.mxu0
        %773 = vmatpush.msra.mxu0 %v723
        %774 = vmatpush.msra.mxu0 %v720
        %775 = vmatpush.msra.mxu0 %v717
        %776 = vmatpush.msra.mxu0 %v714
        %777 = vmatpush.msra.mxu0 %v711
        %778 = vmatpush.msra.mxu0 %v708
        %779 = vmatpush.msra.mxu0 %v705
        %780 = vmatpush.msra.mxu0 %v702
        %781 = vmatpush.msra.mxu0 %v699
        %782 = vmatpush.msra.mxu0 %v696
        %783 = vmatpush.msra.mxu0 %v693
        %784 = vmatpush.msra.mxu0 %v690
        %785 = vmatpush.msra.mxu0 %v687
        %786 = vmatpush.msra.mxu0 %v684
        %787 = vmatpush.msra.mxu0 %v681
        %788 = vmatpush.msra.mxu0 %v678
        %789 = vmatmul.f32.gmra.mxu0 %v449
        %v790 = vpop.f32.mrf.mxu0
        %v791 = vadd.f32 %v729, %v790
        %792 = vdwg.mxu0
        %793 = vadd.xlane.f32.xlu0 %v674
        %v794 = vpop.xlane.xlu0 %793
        %v795 = vmul.f32 %v674, %v674
        %796 = vadd.xlane.f32.xlu0 %v795
        %v797 = vpop.xlane.xlu0 %796
        %v798 = vmul.f32 %v794, 0.03125
        %v799 = vmul.f32 %v797, 0.03125
        %v800 = vmul.f32 %v798, %v798
        %v801 = vsub.f32 %v799, %v800
        %v802 = vmax.f32 %v801, 0.0
        %v803 = vsub.f32 %v674, %v798
        %v804 = vadd.f32 %v802, 1e-06
        %v805 = vrsqrt.pop %v804
        %v806 = vmul.f32 %v805, %v804
        %v807 = vmul.f32 %v806, %v805
        %v808 = vmul.f32 0.5, %v807
        %v809 = vsub.f32 1.5, %v808
        %v810 = vmul.f32 %v805, %v809
        %vm811 = vweird.f32 %v804
        %vm812 = vweird.f32 %v805
        %vm813 = vmor %vm811, %vm812
        %v814 = vsel %vm813, %v805, %v810
        %v815 = vmul.f32 %v803, %v814
        %v816 = vadd.f32 %v771, 1.0
        %v817 = vmul.f32 %v815, %v816
        %v818 = vadd.f32 %v817, %v751
        %s819 = scalar_lea.vmem [#allocation10], 128
        %v820 = vld [vmem:[%s819] sm:$0xff]
        %v821 = vld [vmem:[%s819 + $0x8] sm:$0xff]
        %v822 = vld [vmem:[%s819 + $0x10] sm:$0xff]
        %v823 = vld [vmem:[%s819 + $0x18] sm:$0xff]
        %v824 = vld [vmem:[%s819 + $0x20] sm:$0xff]
        %v825 = vld [vmem:[%s819 + $0x28] sm:$0xff]
        %v826 = vld [vmem:[%s819 + $0x30] sm:$0xff]
        %v827 = vld [vmem:[%s819 + $0x38] sm:$0xff]
        %v828 = vld [vmem:[%s819 + $0x40] sm:$0xff]
        %v829 = vld [vmem:[%s819 + $0x48] sm:$0xff]
        %v830 = vld [vmem:[%s819 + $0x50] sm:$0xff]
        %v831 = vld [vmem:[%s819 + $0x58] sm:$0xff]
        %v832 = vld [vmem:[%s819 + $0x60] sm:$0xff]
        %v833 = vld [vmem:[%s819 + $0x68] sm:$0xff]
        %v834 = vld [vmem:[%s819 + $0x70] sm:$0xff]
        %v835 = vld [vmem:[%s819 + $0x78] sm:$0xff]
        %s836 = scalar_lea.vmem %s5, 1
        %v837 = vld [vmem:[%s836] sm:$0x1]
        %v839 = vperm.slane %v837, 0
        %841 = vmatpush.msra.mxu0 %v835
        %842 = vmatpush.msra.mxu0 %v834
        %843 = vmatpush.msra.mxu0 %v833
        %844 = vmatpush.msra.mxu0 %v832
        %845 = vmatpush.msra.mxu0 %v831
        %846 = vmatpush.msra.mxu0 %v830
        %847 = vmatpush.msra.mxu0 %v829
        %848 = vmatpush.msra.mxu0 %v828
        %849 = vmatpush.msra.mxu0 %v827
        %850 = vmatpush.msra.mxu0 %v826
        %851 = vmatpush.msra.mxu0 %v825
        %852 = vmatpush.msra.mxu0 %v824
        %853 = vmatpush.msra.mxu0 %v823
        %854 = vmatpush.msra.mxu0 %v822
        %855 = vmatpush.msra.mxu0 %v821
        %856 = vmatpush.msra.mxu0 %v820
        %857 = vmatmul.f32.gmra.mxu0 %v818
        %v858 = vpop.f32.mrf.mxu0
        %v859 = vadd.f32 %v839, %v858
        %860 = vdwg.mxu0
        %v861 = vmax.f32 %v859, 0.0
        %s862 = scalar_lea.vmem [#allocation11], 128
        %v863 = vld [vmem:[%s862] sm:$0xff]
        %v864 = vld [vmem:[%s862 + $0x8] sm:$0xff]
        %v865 = vld [vmem:[%s862 + $0x10] sm:$0xff]
        %v866 = vld [vmem:[%s862 + $0x18] sm:$0xff]
        %v867 = vld [vmem:[%s862 + $0x20] sm:$0xff]
        %v868 = vld [vmem:[%s862 + $0x28] sm:$0xff]
        %v869 = vld [vmem:[%s862 + $0x30] sm:$0xff]
        %v870 = vld [vmem:[%s862 + $0x38] sm:$0xff]
        %v871 = vld [vmem:[%s862 + $0x40] sm:$0xff]
        %v872 = vld [vmem:[%s862 + $0x48] sm:$0xff]
        %v873 = vld [vmem:[%s862 + $0x50] sm:$0xff]
        %v874 = vld [vmem:[%s862 + $0x58] sm:$0xff]
        %v875 = vld [vmem:[%s862 + $0x60] sm:$0xff]
        %v876 = vld [vmem:[%s862 + $0x68] sm:$0xff]
        %v877 = vld [vmem:[%s862 + $0x70] sm:$0xff]
        %v878 = vld [vmem:[%s862 + $0x78] sm:$0xff]
        %s879 = scalar_lea.vmem %s7, 1
        %v880 = vld [vmem:[%s879] sm:$0x1]
        %v882 = vperm.slane %v880, 0
        %884 = vmatpush.msra.mxu0 %v878
        %885 = vmatpush.msra.mxu0 %v877
        %886 = vmatpush.msra.mxu0 %v876
        %887 = vmatpush.msra.mxu0 %v875
        %888 = vmatpush.msra.mxu0 %v874
        %889 = vmatpush.msra.mxu0 %v873
        %890 = vmatpush.msra.mxu0 %v872
        %891 = vmatpush.msra.mxu0 %v871
        %892 = vmatpush.msra.mxu0 %v870
        %893 = vmatpush.msra.mxu0 %v869
        %894 = vmatpush.msra.mxu0 %v868
        %895 = vmatpush.msra.mxu0 %v867
        %896 = vmatpush.msra.mxu0 %v866
        %897 = vmatpush.msra.mxu0 %v865
        %898 = vmatpush.msra.mxu0 %v864
        %899 = vmatpush.msra.mxu0 %v863
        %900 = vmatmul.f32.gmra.mxu0 %v861
        %v901 = vpop.f32.mrf.mxu0
        %v902 = vadd.f32 %v882, %v901
        %903 = vdwg.mxu0
        %v904 = vmul.f32 %v791, %v902
        %v905 = vadd.f32 %v674, %v904
        %906 = vst [vmem:[%s427] sm:$0xff] %v905
        %s907 = sand.u32 %s216, 1
        %s908 = scalar_lea.sflag [#allocation4], %s907
        %s909 = sand.u32 %s216, 1
        %s910 = smul.addr %s909, 8
        %s911 = scalar_lea.vmem [#allocation13], %s910
        // Predicated region
        $region77: #{tpu_custom_call.1} parent=51 // pred_check
          %p912 = pneg %p226
        $region78: #{tpu_custom_call.1} parent=51 // pred_check_branch
          %914 = sbr.rel (%p912) target = $region80
        $region79: #{tpu_custom_call.1} parent=51 // pred_region
          %916 = vsyncadd %s908, 0
          %s917 = smul.addr %s30, 8
          %s918 = scalar_lea.hbm %s8, %s917
          %s920 = sshll.u32 %s911, 4
          %s921 = int_to_ptr.vmem [resolvable:$true] %s920
          %s922 = sshll.u32 %s918, 4
          %s923 = int_to_ptr.hbm [resolvable:$true] %s922
          %925 = dma.vmem_to_hbm [thread:$0]  %s921, 128, %s923, %s908
        $region80: #{tpu_custom_call.1} parent=51 // pred_fallthru
          _
      $region52: #{tpu_custom_call.1} parent=5 // pred_fallthru
        _
      %p926 = scmp.le.s32.totalorder 2, %s25
      // Predicated region
      $region81: #{tpu_custom_call.1} parent=5 // pred_check
        %p927 = pneg %p926
      $region82: #{tpu_custom_call.1} parent=5 // pred_check_branch
        %929 = sbr.rel (%p927) target = $region84
      $region83: #{tpu_custom_call.1} parent=5 // pred_region
        %s930 = ssub.s32 %s25, 2
        // Predicated region
        $region85: #{tpu_custom_call.1} parent=83 // pred_check
          %p931 = pneg %p232
        $region86: #{tpu_custom_call.1} parent=83 // pred_check_branch
          %933 = sbr.rel (%p931) target = $region88
        $region87: #{tpu_custom_call.1} parent=83 // pred_region
          %s934 = sand.u32 %s217, 1
          %s935 = scalar_lea.sflag [#allocation4], %s934
          %s936 = sand.u32 %s217, 1
          %s937 = smul.addr %s936, 8
          %s938 = scalar_lea.vmem [#allocation13], %s937
          %940 = dma.done %s935, 128
        $region88: #{tpu_custom_call.1} parent=83 // pred_fallthru
          _
      $region84: #{tpu_custom_call.1} parent=5 // pred_fallthru
        _
    $region6: #{tpu_custom_call.1} parent=1 // loop_footer
      %s29 = sadd.s32 1, %s25
    $region7: #{tpu_custom_call.1} parent=1 // loop_footer_branch
      %24 = sbr.rel target = $region3
    $region8: #{tpu_custom_call.1} parent=1 // loop_exit
      _
    %941 = vsyncpa [#allocation3], 1
    %s942 = scalar_lea.sflag [#allocation3], 1
    %943 = vsyncpa %s942, 1
    %944 = vsyncpa [#allocation6], 1
    %s945 = scalar_lea.sflag [#allocation6], 1
    %946 = vsyncpa %s945, 1
    %947 = vsyncpa [#allocation9], 1
    %948 = vsyncpa [#allocation12], 1
    %949 = vsyncpa [#allocation4], 1
    %s950 = scalar_lea.sflag [#allocation4], 1
    %951 = vsyncpa %s950, 1

</llo_original>
